<compile_context>
chip_gen: v7x
topology: tpu7x:2x2x1
jax: 0.10.0
libtpu: 0.0.40
codegen_flags: <defaults>
</compile_context>

<pallas_src>
import functools

import jax
import jax.numpy as jnp
from jax.experimental import pallas as pl
from jax.experimental.pallas import tpu as pltpu

LANE = 128


def _round_up(n, m):
    return ((n + m - 1) // m) * m


def _mlp_kernel(n_layers, state_ref, next_ref, *refs):
    """refs = (w0a, w0b, b0, w1, b1, ..., wN, bN, out_ref).

    Whole MLP hot path for one batch tile: matmuls on the MXU (f32 accumulate),
    bias add + ReLU on the VPU in f32.
    """
    out_ref = refs[-1]
    wb = refs[:-1]

    # Layer 0: cat([state, state_next]) @ W0 == state @ W0a + state_next @ W0b.
    # Split-weight form keeps both operand loads lane-aligned; a single K=2*S
    # matmul via an in-kernel VMEM concat would need sub-lane-aligned stores.
    h = jnp.dot(state_ref[...], wb[0][...], preferred_element_type=jnp.float32)
    h = h + jnp.dot(next_ref[...], wb[1][...], preferred_element_type=jnp.float32)
    h = h + wb[2][...].astype(jnp.float32)        # bias kept f32
    if n_layers > 1:
        h = jnp.maximum(h, 0.0)

    for i in range(1, n_layers):
        w = wb[1 + 2 * i][...]
        b = wb[2 + 2 * i][...].astype(jnp.float32)
        h = jnp.dot(h.astype(w.dtype), w, preferred_element_type=jnp.float32) + b
        if i < n_layers - 1:                      # ReLU on hidden layers only
            h = jnp.maximum(h, 0.0)

    out_ref[...] = h.astype(out_ref.dtype)


def _prepare_params(weights, biases, param_dtype):
    """Split the first Linear (fused concat) and zero-pad feature dims to 128.

    weights[i]: (in_dim_i, out_dim_i), biases[i]: (out_dim_i,).
    Padded columns/rows are zero, so sliced outputs are unchanged.
    Weights are cast to param_dtype (MXU operands); biases stay f32.
    """
    state_dim = weights[0].shape[0] // 2
    w_list, b_list = [], []
    prev_out_pad = None
    for i, (w, b) in enumerate(zip(weights, biases)):
        in_dim, out_dim = w.shape
        out_pad = _round_up(out_dim, LANE)
        if i == 0:
            w0a = jnp.pad(w[:state_dim], ((0, 0), (0, out_pad - out_dim)))
            w0b = jnp.pad(w[state_dim:], ((0, 0), (0, out_pad - out_dim)))
            w_list += [w0a.astype(param_dtype), w0b.astype(param_dtype)]
        else:
            wp = jnp.pad(w, ((0, prev_out_pad - in_dim), (0, out_pad - out_dim)))
            w_list.append(wp.astype(param_dtype))
        # Bias is added in f32 inside the kernel; keep it f32 (tiny, free).
        b_list.append(
            jnp.pad(b, (0, out_pad - out_dim)).reshape(1, -1).astype(jnp.float32)
        )
        prev_out_pad = out_pad
    return w_list, b_list, prev_out_pad


def _pick_batch_tile(B, pack, batch_tile, max_tile):
    """Pick the batch tile: few grid steps, even step count for v7x's 2 TCs."""
    if batch_tile is not None:
        return _round_up(min(batch_tile, _round_up(B, pack)), pack)
    if B <= pack:                       # degenerate batch: single tiny step
        return _round_up(B, pack)
    nb = max(2, pl.cdiv(B, max_tile))   # >=2 steps so the parallel axis can shard
    nb += nb % 2                        # even -> both v7x TensorCores busy
    return _round_up(pl.cdiv(B, nb), pack)


def inverse_model_forward(state, state_next, weights, biases, *,
                          batch_tile=None, max_batch_tile=4096,
                          param_dtype=jnp.bfloat16):
    """Pallas-backed forward pass of InverseModel.

    state, state_next : (B, state_dim)
    weights[i]        : (in_dim_i, out_dim_i)   (already transposed vs. torch)
    biases[i]         : (out_dim_i,)
    returns           : (B, action_dim) float32
    """
    assert state.shape == state_next.shape
    B, S = state.shape
    n_layers = len(weights)
    action_dim = weights[-1].shape[1]
    assert weights[0].shape[0] == 2 * S

    param_dtype = jnp.dtype(param_dtype)
    # Packed-sublane row granularity: f32 -> 8, bf16 -> 16, int8/fp8 -> 32.
    pack = max(8, 32 // param_dtype.itemsize)

    w_list, b_list, a_pad = _prepare_params(weights, biases, param_dtype)
    # Flatten in kernel order: w0a, w0b, b0, w1, b1, ..., wN, bN.
    flat_params = [w_list[0], w_list[1], b_list[0]]
    for w, b in zip(w_list[2:], b_list[1:]):
        flat_params += [w, b]

    tb = _pick_batch_tile(B, pack, batch_tile, max_batch_tile)
    B_pad = _round_up(B, tb)
    if B_pad != B:
        pad = ((0, B_pad - B), (0, 0))
        state = jnp.pad(state, pad)
        state_next = jnp.pad(state_next, pad)
    nb = B_pad // tb

    state = state.astype(param_dtype)
    state_next = state_next.astype(param_dtype)

    # Output slab in the operand dtype (bf16 default): halves writeback bytes,
    # keeps the 128-lane-dense store; wrapper upcasts after the slice.
    out_dtype = param_dtype

    # Scoped-VMEM budget: double-buffered activations + params + the f32
    # intermediates the body materializes.  Raise the limit (v5e default is
    # 16 MiB) but stay far below v7x's 64 MiB physical VMEM.
    max_feat = max(w.shape[1] for w in w_list)
    vmem_est = (
        2 * 2 * tb * S * param_dtype.itemsize           # inputs, double-buffered
        + 2 * tb * a_pad * jnp.dtype(out_dtype).itemsize  # output tile, dbl-buf
        + sum(int(p.size) * p.dtype.itemsize for p in flat_params)
        + 3 * tb * max_feat * 4                          # f32 layer intermediates
    )
    vmem_limit = int(min(max(vmem_est + (8 << 20), 32 << 20), 64 << 20))

    # Advisory cost estimate so XLA can schedule around the custom call.
    flops = 2 * B_pad * sum(w.shape[0] * w.shape[1] for w in w_list)
    bytes_accessed = (
        2 * B_pad * S * param_dtype.itemsize
        + B_pad * a_pad * jnp.dtype(out_dtype).itemsize
        + sum(int(p.size) * p.dtype.itemsize for p in flat_params)
    )
    cost = pl.CostEstimate(flops=flops, transcendentals=0,
                           bytes_accessed=bytes_accessed)

    kernel = functools.partial(_mlp_kernel, n_layers)
    x_spec = pl.BlockSpec((tb, S), lambda i: (i, 0))
    out_spec = pl.BlockSpec((tb, a_pad), lambda i: (i, 0))

    def _run(param_pipeline_mode):
        # Constant index_maps: params are DMA'd once and stay VMEM-resident.
        if param_pipeline_mode is None:
            param_specs = [pl.BlockSpec(p.shape, lambda i: (0, 0))
                           for p in flat_params]
        else:
            param_specs = [pl.BlockSpec(p.shape, lambda i: (0, 0),
                                        pipeline_mode=param_pipeline_mode)
                           for p in flat_params]
        return pl.pallas_call(
            kernel,
            out_shape=jax.ShapeDtypeStruct((B_pad, a_pad), out_dtype),
            grid=(nb,),
            in_specs=[x_spec, x_spec] + param_specs,
            out_specs=out_spec,
            compiler_params=pltpu.CompilerParams(
                dimension_semantics=("parallel",),   # shard batch over v7x's 2 TCs
                vmem_limit_bytes=vmem_limit,
            ),
            cost_estimate=cost,
        )(state, state_next, *flat_params)

    try:
        # Constant block index -> a single VMEM copy of every param suffices.
        out = _run(pl.Buffered(1))
    except Exception:
        # Installed JAX rejects single-buffering: default double-buffering.
        out = _run(None)

    # Drop batch padding and lane padding (padded weight cols are zero).
    return out[:B, :action_dim].astype(jnp.float32)


def _reference_forward(state, state_next, weights, biases):
    """Pure-JAX reference matching the PyTorch semantics."""
    h = jnp.concatenate([state, state_next], axis=-1)
    for i, (w, b) in enumerate(zip(weights, biases)):
        h = h @ w + b
        if i < len(weights) - 1:
            h = jax.nn.relu(h)
    return h


def _init_params(key, state_dim, action_dim, hidden_dims):
    """Deterministic synthetic Linear params (PyTorch-style uniform ranges)."""
    in_dims = [2 * state_dim] + list(hidden_dims)
    out_dims = list(hidden_dims) + [action_dim]
    weights, biases = [], []
    for in_dim, out_dim in zip(in_dims, out_dims):
        key, kw, kb = jax.random.split(key, 3)
        bound = 1.0 / jnp.sqrt(in_dim)
        # Stored transposed relative to torch (in_dim, out_dim) for y = x @ W + b.
        weights.append(
            jax.random.uniform(kw, (in_dim, out_dim), jnp.float32, -bound, bound)
        )
        biases.append(
            jax.random.uniform(kb, (out_dim,), jnp.float32, -bound, bound)
        )
    return weights, biases


if __name__ == "__main__":
    batch = 256
    state_dim = 16
    hidden_dims = (32, 32)
    action_dim = 4

    key = jax.random.PRNGKey(0)
    key, ks, ksn = jax.random.split(key, 3)
    state = jax.random.normal(ks, (batch, state_dim), jnp.float32)
    state_next = jax.random.normal(ksn, (batch, state_dim), jnp.float32)

    weights, biases = _init_params(key, state_dim, action_dim, hidden_dims)
    ref = _reference_forward(state, state_next, weights, biases)

    # Default path: bf16 MXU operands / bf16 output slab, f32 accumulation.
    # Tile picker gives tb=128, grid=(2,) here -> both v7x TensorCores busy.
    out_bf16 = inverse_model_forward(state, state_next, weights, biases)
    out_bf16 = jax.block_until_ready(out_bf16)
    assert out_bf16.shape == (batch, action_dim), out_bf16.shape
    bf16_err = float(jnp.max(jnp.abs(out_bf16 - ref)))
    assert bf16_err < 5e-2, bf16_err          # bf16 operand/storage precision

    # f32 path: tight check against the pure-JAX reference.
    out_f32 = inverse_model_forward(state, state_next, weights, biases,
                                    param_dtype=jnp.float32)
    out_f32 = jax.block_until_ready(out_f32)
    assert out_f32.shape == (batch, action_dim), out_f32.shape
    assert jnp.allclose(out_f32, ref, atol=1e-5, rtol=1e-5), float(
        jnp.max(jnp.abs(out_f32 - ref))
    )

    print("KERNEL_OK")
</pallas_src>

<mosaic_0001>
module attributes {stable_mosaic.version = 11 : i64} {
  func.func @_mlp_kernel(%arg0: i32, %arg1: memref<128x16xbf16, #tpu.memory_space<vmem>>, %arg2: memref<128x16xbf16, #tpu.memory_space<vmem>>, %arg3: memref<16x128xbf16, #tpu.memory_space<vmem>>, %arg4: memref<16x128xbf16, #tpu.memory_space<vmem>>, %arg5: memref<1x128xf32, #tpu.memory_space<vmem>>, %arg6: memref<128x128xbf16, #tpu.memory_space<vmem>>, %arg7: memref<1x128xf32, #tpu.memory_space<vmem>>, %arg8: memref<128x128xbf16, #tpu.memory_space<vmem>>, %arg9: memref<1x128xf32, #tpu.memory_space<vmem>>, %arg10: memref<128x128xbf16, #tpu.memory_space<vmem>>) attributes {dimension_semantics = [#tpu.dimension_semantics<parallel>], iteration_bounds = array<i64: 2>, scalar_prefetch = 0 : i64, scratch_operands = 0 : i64, tpu.core_type = #tpu.core_type<tc>, window_params = [{transform_indices = @transform_0, window_bounds = array<i64: 128, 16>}, {transform_indices = @transform_1, window_bounds = array<i64: 128, 16>}, {pipeline_mode = #tpu.pipeline_mode<synchronous>, transform_indices = @transform_2, window_bounds = array<i64: 16, 128>}, {pipeline_mode = #tpu.pipeline_mode<synchronous>, transform_indices = @transform_3, window_bounds = array<i64: 16, 128>}, {pipeline_mode = #tpu.pipeline_mode<synchronous>, transform_indices = @transform_4, window_bounds = array<i64: 1, 128>}, {pipeline_mode = #tpu.pipeline_mode<synchronous>, transform_indices = @transform_5, window_bounds = array<i64: 128, 128>}, {pipeline_mode = #tpu.pipeline_mode<synchronous>, transform_indices = @transform_6, window_bounds = array<i64: 1, 128>}, {pipeline_mode = #tpu.pipeline_mode<synchronous>, transform_indices = @transform_7, window_bounds = array<i64: 128, 128>}, {pipeline_mode = #tpu.pipeline_mode<synchronous>, transform_indices = @transform_8, window_bounds = array<i64: 1, 128>}, {transform_indices = @transform_9, window_bounds = array<i64: 128, 128>}]} {
    %c0 = arith.constant 0 : index
    %c0_0 = arith.constant 0 : index
    %0 = vector.load %arg1[%c0, %c0_0] : memref<128x16xbf16, #tpu.memory_space<vmem>>, vector<128x16xbf16>
    %c0_1 = arith.constant 0 : index
    %c0_2 = arith.constant 0 : index
    %1 = vector.load %arg3[%c0_1, %c0_2] : memref<16x128xbf16, #tpu.memory_space<vmem>>, vector<16x128xbf16>
    %cst = arith.constant dense<0.000000e+00> : vector<128x128xf32>
    %2 = tpu.matmul %0, %1, %cst {dimension_numbers = #tpu.dot_dimension_numbers<[1], [0], [0], [1], [0, 0, 1, 1], [], []>} : vector<128x16xbf16>, vector<16x128xbf16>, vector<128x128xf32> -> vector<128x128xf32>
    %c0_3 = arith.constant 0 : index
    %c0_4 = arith.constant 0 : index
    %3 = vector.load %arg2[%c0_3, %c0_4] : memref<128x16xbf16, #tpu.memory_space<vmem>>, vector<128x16xbf16>
    %c0_5 = arith.constant 0 : index
    %c0_6 = arith.constant 0 : index
    %4 = vector.load %arg4[%c0_5, %c0_6] : memref<16x128xbf16, #tpu.memory_space<vmem>>, vector<16x128xbf16>
    %cst_7 = arith.constant dense<0.000000e+00> : vector<128x128xf32>
    %5 = tpu.matmul %3, %4, %cst_7 {dimension_numbers = #tpu.dot_dimension_numbers<[1], [0], [0], [1], [0, 0, 1, 1], [], []>} : vector<128x16xbf16>, vector<16x128xbf16>, vector<128x128xf32> -> vector<128x128xf32>
    %6 = arith.addf %2, %5 : vector<128x128xf32>
    %c0_8 = arith.constant 0 : index
    %c0_9 = arith.constant 0 : index
    %7 = vector.load %arg5[%c0_8, %c0_9] : memref<1x128xf32, #tpu.memory_space<vmem>>, vector<1x128xf32>
    %8 = vector.broadcast %7 : vector<1x128xf32> to vector<128x128xf32>
    %9 = arith.addf %6, %8 : vector<128x128xf32>
    %cst_10 = arith.constant 0.000000e+00 : f32
    %10 = vector.broadcast %cst_10 : f32 to vector<128x128xf32>
    %11 = arith.maximumf %9, %10 : vector<128x128xf32>
    %c0_11 = arith.constant 0 : index
    %c0_12 = arith.constant 0 : index
    %12 = vector.load %arg6[%c0_11, %c0_12] : memref<128x128xbf16, #tpu.memory_space<vmem>>, vector<128x128xbf16>
    %c0_13 = arith.constant 0 : index
    %c0_14 = arith.constant 0 : index
    %13 = vector.load %arg7[%c0_13, %c0_14] : memref<1x128xf32, #tpu.memory_space<vmem>>, vector<1x128xf32>
    %14 = arith.truncf %11 : vector<128x128xf32> to vector<128x128xbf16>
    %cst_15 = arith.constant dense<0.000000e+00> : vector<128x128xf32>
    %15 = tpu.matmul %14, %12, %cst_15 {dimension_numbers = #tpu.dot_dimension_numbers<[1], [0], [0], [1], [0, 0, 1, 1], [], []>} : vector<128x128xbf16>, vector<128x128xbf16>, vector<128x128xf32> -> vector<128x128xf32>
    %16 = vector.broadcast %13 : vector<1x128xf32> to vector<128x128xf32>
    %17 = arith.addf %15, %16 : vector<128x128xf32>
    %cst_16 = arith.constant 0.000000e+00 : f32
    %18 = vector.broadcast %cst_16 : f32 to vector<128x128xf32>
    %19 = arith.maximumf %17, %18 : vector<128x128xf32>
    %c0_17 = arith.constant 0 : index
    %c0_18 = arith.constant 0 : index
    %20 = vector.load %arg8[%c0_17, %c0_18] : memref<128x128xbf16, #tpu.memory_space<vmem>>, vector<128x128xbf16>
    %c0_19 = arith.constant 0 : index
    %c0_20 = arith.constant 0 : index
    %21 = vector.load %arg9[%c0_19, %c0_20] : memref<1x128xf32, #tpu.memory_space<vmem>>, vector<1x128xf32>
    %22 = arith.truncf %19 : vector<128x128xf32> to vector<128x128xbf16>
    %cst_21 = arith.constant dense<0.000000e+00> : vector<128x128xf32>
    %23 = tpu.matmul %22, %20, %cst_21 {dimension_numbers = #tpu.dot_dimension_numbers<[1], [0], [0], [1], [0, 0, 1, 1], [], []>} : vector<128x128xbf16>, vector<128x128xbf16>, vector<128x128xf32> -> vector<128x128xf32>
    %24 = vector.broadcast %21 : vector<1x128xf32> to vector<128x128xf32>
    %25 = arith.addf %23, %24 : vector<128x128xf32>
    %26 = arith.truncf %25 : vector<128x128xf32> to vector<128x128xbf16>
    %c0_22 = arith.constant 0 : index
    %c0_23 = arith.constant 0 : index
    %27 = vector.load %arg10[%c0_22, %c0_23] : memref<128x128xbf16, #tpu.memory_space<vmem>>, vector<128x128xbf16>
    tpu.vector_store %arg10[%c0_22, %c0_23], %26 {strides = array<i32>} : memref<128x128xbf16, #tpu.memory_space<vmem>>, vector<128x128xbf16>,
    return
  }
  func.func @transform_0(%arg0: i32) -> (i32, i32) {
    %c0_i32 = arith.constant 0 : i32
    %c0_i32_0 = arith.constant 0 : i32
    return %arg0, %c0_i32 : i32, i32
  }
  func.func @transform_1(%arg0: i32) -> (i32, i32) {
    %c0_i32 = arith.constant 0 : i32
    %c0_i32_0 = arith.constant 0 : i32
    return %arg0, %c0_i32 : i32, i32
  }
  func.func @transform_2(%arg0: i32) -> (i32, i32) {
    %c0_i32 = arith.constant 0 : i32
    %c0_i32_0 = arith.constant 0 : i32
    %c0_i32_1 = arith.constant 0 : i32
    return %c0_i32, %c0_i32_0 : i32, i32
  }
  func.func @transform_3(%arg0: i32) -> (i32, i32) {
    %c0_i32 = arith.constant 0 : i32
    %c0_i32_0 = arith.constant 0 : i32
    %c0_i32_1 = arith.constant 0 : i32
    return %c0_i32, %c0_i32_0 : i32, i32
  }
  func.func @transform_4(%arg0: i32) -> (i32, i32) {
    %c0_i32 = arith.constant 0 : i32
    %c0_i32_0 = arith.constant 0 : i32
    %c0_i32_1 = arith.constant 0 : i32
    return %c0_i32, %c0_i32_0 : i32, i32
  }
  func.func @transform_5(%arg0: i32) -> (i32, i32) {
    %c0_i32 = arith.constant 0 : i32
    %c0_i32_0 = arith.constant 0 : i32
    %c0_i32_1 = arith.constant 0 : i32
    return %c0_i32, %c0_i32_0 : i32, i32
  }
  func.func @transform_6(%arg0: i32) -> (i32, i32) {
    %c0_i32 = arith.constant 0 : i32
    %c0_i32_0 = arith.constant 0 : i32
    %c0_i32_1 = arith.constant 0 : i32
    return %c0_i32, %c0_i32_0 : i32, i32
  }
  func.func @transform_7(%arg0: i32) -> (i32, i32) {
    %c0_i32 = arith.constant 0 : i32
    %c0_i32_0 = arith.constant 0 : i32
    %c0_i32_1 = arith.constant 0 : i32
    return %c0_i32, %c0_i32_0 : i32, i32
  }
  func.func @transform_8(%arg0: i32) -> (i32, i32) {
    %c0_i32 = arith.constant 0 : i32
    %c0_i32_0 = arith.constant 0 : i32
    %c0_i32_1 = arith.constant 0 : i32
    return %c0_i32, %c0_i32_0 : i32, i32
  }
  func.func @transform_9(%arg0: i32) -> (i32, i32) {
    %c0_i32 = arith.constant 0 : i32
    %c0_i32_0 = arith.constant 0 : i32
    return %arg0, %c0_i32 : i32, i32
  }
}

module attributes {stable_mosaic.version = 11 : i64} {
  func.func @_mlp_kernel(%arg0: i32, %arg1: memref<128x16xbf16, #tpu.memory_space<vmem>>, %arg2: memref<128x16xbf16, #tpu.memory_space<vmem>>, %arg3: memref<16x128xbf16, #tpu.memory_space<vmem>>, %arg4: memref<16x128xbf16, #tpu.memory_space<vmem>>, %arg5: memref<1x128xf32, #tpu.memory_space<vmem>>, %arg6: memref<128x128xbf16, #tpu.memory_space<vmem>>, %arg7: memref<1x128xf32, #tpu.memory_space<vmem>>, %arg8: memref<128x128xbf16, #tpu.memory_space<vmem>>, %arg9: memref<1x128xf32, #tpu.memory_space<vmem>>, %arg10: memref<128x128xbf16, #tpu.memory_space<vmem>>) attributes {dimension_semantics = [#tpu.dimension_semantics<parallel>], iteration_bounds = array<i64: 2>, scalar_prefetch = 0 : i64, scratch_operands = 0 : i64, tpu.core_type = #tpu.core_type<tc>, window_params = [{transform_indices = @transform_0, window_bounds = array<i64: 128, 16>}, {transform_indices = @transform_1, window_bounds = array<i64: 128, 16>}, {pipeline_mode = #tpu.pipeline_mode<synchronous>, transform_indices = @transform_2, window_bounds = array<i64: 16, 128>}, {pipeline_mode = #tpu.pipeline_mode<synchronous>, transform_indices = @transform_3, window_bounds = array<i64: 16, 128>}, {pipeline_mode = #tpu.pipeline_mode<synchronous>, transform_indices = @transform_4, window_bounds = array<i64: 1, 128>}, {pipeline_mode = #tpu.pipeline_mode<synchronous>, transform_indices = @transform_5, window_bounds = array<i64: 128, 128>}, {pipeline_mode = #tpu.pipeline_mode<synchronous>, transform_indices = @transform_6, window_bounds = array<i64: 1, 128>}, {pipeline_mode = #tpu.pipeline_mode<synchronous>, transform_indices = @transform_7, window_bounds = array<i64: 128, 128>}, {pipeline_mode = #tpu.pipeline_mode<synchronous>, transform_indices = @transform_8, window_bounds = array<i64: 1, 128>}, {transform_indices = @transform_9, window_bounds = array<i64: 128, 128>}]} {
    %c0 = arith.constant 0 : index
    %c0_0 = arith.constant 0 : index
    %0 = vector.load %arg1[%c0, %c0_0] : memref<128x16xbf16, #tpu.memory_space<vmem>>, vector<128x16xbf16>
    %c0_1 = arith.constant 0 : index
    %c0_2 = arith.constant 0 : index
    %1 = vector.load %arg3[%c0_1, %c0_2] : memref<16x128xbf16, #tpu.memory_space<vmem>>, vector<16x128xbf16>
    %cst = arith.constant dense<0.000000e+00> : vector<128x128xf32>
    %2 = tpu.matmul %0, %1, %cst {dimension_numbers = #tpu.dot_dimension_numbers<[1], [0], [0], [1], [0, 0, 1, 1], [], []>} : vector<128x16xbf16>, vector<16x128xbf16>, vector<128x128xf32> -> vector<128x128xf32>
    %c0_3 = arith.constant 0 : index
    %c0_4 = arith.constant 0 : index
    %3 = vector.load %arg2[%c0_3, %c0_4] : memref<128x16xbf16, #tpu.memory_space<vmem>>, vector<128x16xbf16>
    %c0_5 = arith.constant 0 : index
    %c0_6 = arith.constant 0 : index
    %4 = vector.load %arg4[%c0_5, %c0_6] : memref<16x128xbf16, #tpu.memory_space<vmem>>, vector<16x128xbf16>
    %cst_7 = arith.constant dense<0.000000e+00> : vector<128x128xf32>
    %5 = tpu.matmul %3, %4, %cst_7 {dimension_numbers = #tpu.dot_dimension_numbers<[1], [0], [0], [1], [0, 0, 1, 1], [], []>} : vector<128x16xbf16>, vector<16x128xbf16>, vector<128x128xf32> -> vector<128x128xf32>
    %6 = arith.addf %2, %5 : vector<128x128xf32>
    %c0_8 = arith.constant 0 : index
    %c0_9 = arith.constant 0 : index
    %7 = vector.load %arg5[%c0_8, %c0_9] : memref<1x128xf32, #tpu.memory_space<vmem>>, vector<1x128xf32>
    %8 = vector.broadcast %7 : vector<1x128xf32> to vector<128x128xf32>
    %9 = arith.addf %6, %8 : vector<128x128xf32>
    %cst_10 = arith.constant 0.000000e+00 : f32
    %10 = vector.broadcast %cst_10 : f32 to vector<128x128xf32>
    %11 = arith.maximumf %9, %10 : vector<128x128xf32>
    %c0_11 = arith.constant 0 : index
    %c0_12 = arith.constant 0 : index
    %12 = vector.load %arg6[%c0_11, %c0_12] : memref<128x128xbf16, #tpu.memory_space<vmem>>, vector<128x128xbf16>
    %c0_13 = arith.constant 0 : index
    %c0_14 = arith.constant 0 : index
    %13 = vector.load %arg7[%c0_13, %c0_14] : memref<1x128xf32, #tpu.memory_space<vmem>>, vector<1x128xf32>
    %14 = arith.truncf %11 : vector<128x128xf32> to vector<128x128xbf16>
    %cst_15 = arith.constant dense<0.000000e+00> : vector<128x128xf32>
    %15 = tpu.matmul %14, %12, %cst_15 {dimension_numbers = #tpu.dot_dimension_numbers<[1], [0], [0], [1], [0, 0, 1, 1], [], []>} : vector<128x128xbf16>, vector<128x128xbf16>, vector<128x128xf32> -> vector<128x128xf32>
    %16 = vector.broadcast %13 : vector<1x128xf32> to vector<128x128xf32>
    %17 = arith.addf %15, %16 : vector<128x128xf32>
    %cst_16 = arith.constant 0.000000e+00 : f32
    %18 = vector.broadcast %cst_16 : f32 to vector<128x128xf32>
    %19 = arith.maximumf %17, %18 : vector<128x128xf32>
    %c0_17 = arith.constant 0 : index
    %c0_18 = arith.constant 0 : index
    %20 = vector.load %arg8[%c0_17, %c0_18] : memref<128x128xbf16, #tpu.memory_space<vmem>>, vector<128x128xbf16>
    %c0_19 = arith.constant 0 : index
    %c0_20 = arith.constant 0 : index
    %21 = vector.load %arg9[%c0_19, %c0_20] : memref<1x128xf32, #tpu.memory_space<vmem>>, vector<1x128xf32>
    %22 = arith.truncf %19 : vector<128x128xf32> to vector<128x128xbf16>
    %cst_21 = arith.constant dense<0.000000e+00> : vector<128x128xf32>
    %23 = tpu.matmul %22, %20, %cst_21 {dimension_numbers = #tpu.dot_dimension_numbers<[1], [0], [0], [1], [0, 0, 1, 1], [], []>} : vector<128x128xbf16>, vector<128x128xbf16>, vector<128x128xf32> -> vector<128x128xf32>
    %24 = vector.broadcast %21 : vector<1x128xf32> to vector<128x128xf32>
    %25 = arith.addf %23, %24 : vector<128x128xf32>
    %26 = arith.truncf %25 : vector<128x128xf32> to vector<128x128xbf16>
    %c0_22 = arith.constant 0 : index
    %c0_23 = arith.constant 0 : index
    %27 = vector.load %arg10[%c0_22, %c0_23] : memref<128x128xbf16, #tpu.memory_space<vmem>>, vector<128x128xbf16>
    tpu.vector_store %arg10[%c0_22, %c0_23], %26 {strides = array<i32>} : memref<128x128xbf16, #tpu.memory_space<vmem>>, vector<128x128xbf16>,
    return
  }
  func.func @transform_0(%arg0: i32) -> (i32, i32) {
    %c0_i32 = arith.constant 0 : i32
    %c0_i32_0 = arith.constant 0 : i32
    return %arg0, %c0_i32 : i32, i32
  }
  func.func @transform_1(%arg0: i32) -> (i32, i32) {
    %c0_i32 = arith.constant 0 : i32
    %c0_i32_0 = arith.constant 0 : i32
    return %arg0, %c0_i32 : i32, i32
  }
  func.func @transform_2(%arg0: i32) -> (i32, i32) {
    %c0_i32 = arith.constant 0 : i32
    %c0_i32_0 = arith.constant 0 : i32
    %c0_i32_1 = arith.constant 0 : i32
    return %c0_i32, %c0_i32_0 : i32, i32
  }
  func.func @transform_3(%arg0: i32) -> (i32, i32) {
    %c0_i32 = arith.constant 0 : i32
    %c0_i32_0 = arith.constant 0 : i32
    %c0_i32_1 = arith.constant 0 : i32
    return %c0_i32, %c0_i32_0 : i32, i32
  }
  func.func @transform_4(%arg0: i32) -> (i32, i32) {
    %c0_i32 = arith.constant 0 : i32
    %c0_i32_0 = arith.constant 0 : i32
    %c0_i32_1 = arith.constant 0 : i32
    return %c0_i32, %c0_i32_0 : i32, i32
  }
  func.func @transform_5(%arg0: i32) -> (i32, i32) {
    %c0_i32 = arith.constant 0 : i32
    %c0_i32_0 = arith.constant 0 : i32
    %c0_i32_1 = arith.constant 0 : i32
    return %c0_i32, %c0_i32_0 : i32, i32
  }
  func.func @transform_6(%arg0: i32) -> (i32, i32) {
    %c0_i32 = arith.constant 0 : i32
    %c0_i32_0 = arith.constant 0 : i32
    %c0_i32_1 = arith.constant 0 : i32
    return %c0_i32, %c0_i32_0 : i32, i32
  }
  func.func @transform_7(%arg0: i32) -> (i32, i32) {
    %c0_i32 = arith.constant 0 : i32
    %c0_i32_0 = arith.constant 0 : i32
    %c0_i32_1 = arith.constant 0 : i32
    return %c0_i32, %c0_i32_0 : i32, i32
  }
  func.func @transform_8(%arg0: i32) -> (i32, i32) {
    %c0_i32 = arith.constant 0 : i32
    %c0_i32_0 = arith.constant 0 : i32
    %c0_i32_1 = arith.constant 0 : i32
    return %c0_i32, %c0_i32_0 : i32, i32
  }
  func.func @transform_9(%arg0: i32) -> (i32, i32) {
    %c0_i32 = arith.constant 0 : i32
    %c0_i32_0 = arith.constant 0 : i32
    return %arg0, %c0_i32 : i32, i32
  }
}

</mosaic_0001>

<llo_original>
// kernel: tpu_custom_call.1
$region0: #{tpu_custom_call.1}
  #allocation0 [shape = 'u32[]', space=smem, size = 0x4, offset = 0x4, fixed_abs, tag = 'smem constant byte address 0x4 - core index']
  #allocation1 [shape = 'u32[144,128]{1,0:T(1,128)}', space=vmem, size = 0x12000, scoped, tag = 'internal scratch']
  %s0 = inlined_call_operand.vmem [shape: bf16[256,16], index: 0, kind: input, shape index: {}]
  %s1 = inlined_call_operand.vmem [shape: bf16[256,16], index: 1, kind: input, shape index: {}]
  %s2 = inlined_call_operand.vmem [shape: bf16[16,128], index: 2, kind: input, shape index: {}]
  %s3 = inlined_call_operand.vmem [shape: bf16[16,128], index: 3, kind: input, shape index: {}]
  %s4 = inlined_call_operand.vmem [shape: f32[1,128], index: 4, kind: input, shape index: {}]
  %s5 = inlined_call_operand.vmem [shape: bf16[128,128], index: 5, kind: input, shape index: {}]
  %s6 = inlined_call_operand.vmem [shape: f32[1,128], index: 6, kind: input, shape index: {}]
  %s7 = inlined_call_operand.vmem [shape: bf16[128,128], index: 7, kind: input, shape index: {}]
  %s8 = inlined_call_operand.vmem [shape: f32[1,128], index: 8, kind: input, shape index: {}]
  %s9 = inlined_call_operand.hbm [shape: bf16[256,128], index: 9, kind: output, shape index: {}]
  %s10 = sld [smem:[#allocation0]]
  $region69: #{tpu_custom_call.1} parent=0
    _
  %s12 = ssub.s32 1, %s10
  %s13 = scalar_select 0, %s12, %s10
  $region1: #{tpu_custom_call.1} parent=0
    #allocation2 [shape = 'u8[65536]{0}', space=vmem, size = 0x10000, scoped, tag = 'output window, operand 0']
    #allocation3 [shape = 's32[2]{0}', space=sflag, size = 0x8, scoped, tag = 'scoped memory for tpu_custom_call.1']
    %14 = vsyncpa [#allocation3], 0
    %s15 = scalar_lea.sflag [#allocation3], 1
    %16 = vsyncpa %s15, 0
    loop: start=0, step=1, limit=4
    $region2: #{tpu_custom_call.1} parent=1 // loop_pre_header
      _
    $region3: #{tpu_custom_call.1} parent=1 // loop_header
      %s18 = sphi 0, %s22
      %p19 = scmp.ge.s32.totalorder %s18, 4
      %s28 = sphi 0, %s30
      %s31 = sphi 0, %s28
      %s32 = sphi 0, %s31
      %s48 = sphi 0, %s32
      %s54 = sphi 0, %s56
      %s57 = sphi 0, %s54
      %s58 = sphi 0, %s57
      %s74 = sphi 0, %s58
      %s78 = sphi 0, %s78
      %s80 = sphi 0, %s78
      %s81 = sphi 0, %s80
      %s95 = sphi 0, %s81
      %s99 = sphi 0, %s99
      %s101 = sphi 0, %s99
      %s102 = sphi 0, %s101
      %s116 = sphi 0, %s102
      %s120 = sphi 0, %s120
      %s122 = sphi 0, %s120
      %s123 = sphi 0, %s122
      %s137 = sphi 0, %s123
      %s141 = sphi 0, %s141
      %s143 = sphi 0, %s141
      %s144 = sphi 0, %s143
      %s158 = sphi 0, %s144
      %s162 = sphi 0, %s162
      %s164 = sphi 0, %s162
      %s165 = sphi 0, %s164
      %s179 = sphi 0, %s165
      %s183 = sphi 0, %s183
      %s185 = sphi 0, %s183
      %s186 = sphi 0, %s185
      %s200 = sphi 0, %s186
      %s204 = sphi 0, %s204
      %s206 = sphi 0, %s204
      %s207 = sphi 0, %s206
      %s221 = sphi 0, %s207
      %s227 = sphi 0, %s229
      %s230 = sphi 0, %s227
      %s231 = sphi 0, %s230
      %s247 = sphi 0, %s231
    $region4: #{tpu_custom_call.1} parent=1 // loop_header_branch
      %21 = sbr.rel (%p19) target = $region8
    $region5: #{tpu_custom_call.1} parent=1 // loop_body
      %s23 = ssub.s32 %s18, 1
      %s24 = ssub.s32 %s18, 2
      %s25 = sadd.s32 %s18, 1
      %s26 = ssub.s32 %s18, %s25
      %p27 = scmp.eq.s32.totalorder %s26, 0
      %s29 = sadd.s32 %s28, 1
      %s30 = scalar_select %p27, %s28, %s29
      %p33 = pneg %p27
      %p34 = scmp.eq.s32.totalorder %s18, 1
      %p35 = por %p33, %p34
      %p36 = scmp.ne.s32.totalorder %s28, %s31
      %p37 = scmp.eq.s32.totalorder %s18, 0
      %p38 = por %p36, %p37
      %p39 = scmp.ne.s32.totalorder %s28, %s31
      %p40 = scmp.eq.s32.totalorder %s23, 1
      %p41 = por %p39, %p40
      %p42 = scmp.ne.s32.totalorder %s31, %s32
      %p43 = scmp.eq.s32.totalorder %s23, 0
      %p44 = por %p42, %p43
      %p45 = scmp.ne.s32.totalorder %s31, %s32
      %p46 = scmp.eq.s32.totalorder %s24, 1
      %p47 = por %p45, %p46
      %p49 = scmp.ne.s32.totalorder %s32, %s48
      %p50 = scmp.eq.s32.totalorder %s24, 0
      %p51 = por %p49, %p50
      %s52 = ssub.s32 %s18, %s25
      %p53 = scmp.eq.s32.totalorder %s52, 0
      %s55 = sadd.s32 %s54, 1
      %s56 = scalar_select %p53, %s54, %s55
      %p59 = pneg %p53
      %p60 = scmp.eq.s32.totalorder %s18, 1
      %p61 = por %p59, %p60
      %p62 = scmp.ne.s32.totalorder %s54, %s57
      %p63 = scmp.eq.s32.totalorder %s18, 0
      %p64 = por %p62, %p63
      %p65 = scmp.ne.s32.totalorder %s54, %s57
      %p66 = scmp.eq.s32.totalorder %s23, 1
      %p67 = por %p65, %p66
      %p68 = scmp.ne.s32.totalorder %s57, %s58
      %p69 = scmp.eq.s32.totalorder %s23, 0
      %p70 = por %p68, %p69
      %p71 = scmp.ne.s32.totalorder %s57, %s58
      %p72 = scmp.eq.s32.totalorder %s24, 1
      %p73 = por %p71, %p72
      %p75 = scmp.ne.s32.totalorder %s58, %s74
      %p76 = scmp.eq.s32.totalorder %s24, 0
      %p77 = por %p75, %p76
      %s79 = sadd.s32 %s78, 1
      %p82 = scmp.eq.s32.totalorder %s18, 1
      %p83 = scmp.ne.s32.totalorder %s78, %s80
      %p84 = scmp.eq.s32.totalorder %s18, 0
      %p85 = por %p83, %p84
      %p86 = scmp.ne.s32.totalorder %s78, %s80
      %p87 = scmp.eq.s32.totalorder %s23, 1
      %p88 = por %p86, %p87
      %p89 = scmp.ne.s32.totalorder %s80, %s81
      %p90 = scmp.eq.s32.totalorder %s23, 0
      %p91 = por %p89, %p90
      %p92 = scmp.ne.s32.totalorder %s80, %s81
      %p93 = scmp.eq.s32.totalorder %s24, 1
      %p94 = por %p92, %p93
      %p96 = scmp.ne.s32.totalorder %s81, %s95
      %p97 = scmp.eq.s32.totalorder %s24, 0
      %p98 = por %p96, %p97
      %s100 = sadd.s32 %s99, 1
      %p103 = scmp.eq.s32.totalorder %s18, 1
      %p104 = scmp.ne.s32.totalorder %s99, %s101
      %p105 = scmp.eq.s32.totalorder %s18, 0
      %p106 = por %p104, %p105
      %p107 = scmp.ne.s32.totalorder %s99, %s101
      %p108 = scmp.eq.s32.totalorder %s23, 1
      %p109 = por %p107, %p108
      %p110 = scmp.ne.s32.totalorder %s101, %s102
      %p111 = scmp.eq.s32.totalorder %s23, 0
      %p112 = por %p110, %p111
      %p113 = scmp.ne.s32.totalorder %s101, %s102
      %p114 = scmp.eq.s32.totalorder %s24, 1
      %p115 = por %p113, %p114
      %p117 = scmp.ne.s32.totalorder %s102, %s116
      %p118 = scmp.eq.s32.totalorder %s24, 0
      %p119 = por %p117, %p118
      %s121 = sadd.s32 %s120, 1
      %p124 = scmp.eq.s32.totalorder %s18, 1
      %p125 = scmp.ne.s32.totalorder %s120, %s122
      %p126 = scmp.eq.s32.totalorder %s18, 0
      %p127 = por %p125, %p126
      %p128 = scmp.ne.s32.totalorder %s120, %s122
      %p129 = scmp.eq.s32.totalorder %s23, 1
      %p130 = por %p128, %p129
      %p131 = scmp.ne.s32.totalorder %s122, %s123
      %p132 = scmp.eq.s32.totalorder %s23, 0
      %p133 = por %p131, %p132
      %p134 = scmp.ne.s32.totalorder %s122, %s123
      %p135 = scmp.eq.s32.totalorder %s24, 1
      %p136 = por %p134, %p135
      %p138 = scmp.ne.s32.totalorder %s123, %s137
      %p139 = scmp.eq.s32.totalorder %s24, 0
      %p140 = por %p138, %p139
      %s142 = sadd.s32 %s141, 1
      %p145 = scmp.eq.s32.totalorder %s18, 1
      %p146 = scmp.ne.s32.totalorder %s141, %s143
      %p147 = scmp.eq.s32.totalorder %s18, 0
      %p148 = por %p146, %p147
      %p149 = scmp.ne.s32.totalorder %s141, %s143
      %p150 = scmp.eq.s32.totalorder %s23, 1
      %p151 = por %p149, %p150
      %p152 = scmp.ne.s32.totalorder %s143, %s144
      %p153 = scmp.eq.s32.totalorder %s23, 0
      %p154 = por %p152, %p153
      %p155 = scmp.ne.s32.totalorder %s143, %s144
      %p156 = scmp.eq.s32.totalorder %s24, 1
      %p157 = por %p155, %p156
      %p159 = scmp.ne.s32.totalorder %s144, %s158
      %p160 = scmp.eq.s32.totalorder %s24, 0
      %p161 = por %p159, %p160
      %s163 = sadd.s32 %s162, 1
      %p166 = scmp.eq.s32.totalorder %s18, 1
      %p167 = scmp.ne.s32.totalorder %s162, %s164
      %p168 = scmp.eq.s32.totalorder %s18, 0
      %p169 = por %p167, %p168
      %p170 = scmp.ne.s32.totalorder %s162, %s164
      %p171 = scmp.eq.s32.totalorder %s23, 1
      %p172 = por %p170, %p171
      %p173 = scmp.ne.s32.totalorder %s164, %s165
      %p174 = scmp.eq.s32.totalorder %s23, 0
      %p175 = por %p173, %p174
      %p176 = scmp.ne.s32.totalorder %s164, %s165
      %p177 = scmp.eq.s32.totalorder %s24, 1
      %p178 = por %p176, %p177
      %p180 = scmp.ne.s32.totalorder %s165, %s179
      %p181 = scmp.eq.s32.totalorder %s24, 0
      %p182 = por %p180, %p181
      %s184 = sadd.s32 %s183, 1
      %p187 = scmp.eq.s32.totalorder %s18, 1
      %p188 = scmp.ne.s32.totalorder %s183, %s185
      %p189 = scmp.eq.s32.totalorder %s18, 0
      %p190 = por %p188, %p189
      %p191 = scmp.ne.s32.totalorder %s183, %s185
      %p192 = scmp.eq.s32.totalorder %s23, 1
      %p193 = por %p191, %p192
      %p194 = scmp.ne.s32.totalorder %s185, %s186
      %p195 = scmp.eq.s32.totalorder %s23, 0
      %p196 = por %p194, %p195
      %p197 = scmp.ne.s32.totalorder %s185, %s186
      %p198 = scmp.eq.s32.totalorder %s24, 1
      %p199 = por %p197, %p198
      %p201 = scmp.ne.s32.totalorder %s186, %s200
      %p202 = scmp.eq.s32.totalorder %s24, 0
      %p203 = por %p201, %p202
      %s205 = sadd.s32 %s204, 1
      %p208 = scmp.eq.s32.totalorder %s18, 1
      %p209 = scmp.ne.s32.totalorder %s204, %s206
      %p210 = scmp.eq.s32.totalorder %s18, 0
      %p211 = por %p209, %p210
      %p212 = scmp.ne.s32.totalorder %s204, %s206
      %p213 = scmp.eq.s32.totalorder %s23, 1
      %p214 = por %p212, %p213
      %p215 = scmp.ne.s32.totalorder %s206, %s207
      %p216 = scmp.eq.s32.totalorder %s23, 0
      %p217 = por %p215, %p216
      %p218 = scmp.ne.s32.totalorder %s206, %s207
      %p219 = scmp.eq.s32.totalorder %s24, 1
      %p220 = por %p218, %p219
      %p222 = scmp.ne.s32.totalorder %s207, %s221
      %p223 = scmp.eq.s32.totalorder %s24, 0
      %p224 = por %p222, %p223
      %s225 = ssub.s32 %s18, %s25
      %p226 = scmp.eq.s32.totalorder %s225, 0
      %s228 = sadd.s32 %s227, 1
      %s229 = scalar_select %p226, %s227, %s228
      %p232 = pneg %p226
      %p233 = scmp.eq.s32.totalorder %s18, 1
      %p234 = por %p232, %p233
      %p235 = scmp.ne.s32.totalorder %s227, %s230
      %p236 = scmp.eq.s32.totalorder %s18, 0
      %p237 = por %p235, %p236
      %p238 = scmp.ne.s32.totalorder %s227, %s230
      %p239 = scmp.eq.s32.totalorder %s23, 1
      %p240 = por %p238, %p239
      %p241 = scmp.ne.s32.totalorder %s230, %s231
      %p242 = scmp.eq.s32.totalorder %s23, 0
      %p243 = por %p241, %p242
      %p244 = scmp.ne.s32.totalorder %s230, %s231
      %p245 = scmp.eq.s32.totalorder %s24, 1
      %p246 = por %p244, %p245
      %p248 = scmp.ne.s32.totalorder %s231, %s247
      %p249 = scmp.eq.s32.totalorder %s24, 0
      %p250 = por %p248, %p249
      %p251 = scmp.le.s32.totalorder 1, %s18
      %p252 = scmp.lt.s32.totalorder %s18, 3
      %p253 = pnand %p251, %p252
      %p254 = pneg %p253
      // Predicated region
      $region9: #{tpu_custom_call.1} parent=5 // pred_check
        _
      $region10: #{tpu_custom_call.1} parent=5 // pred_check_branch
        %256 = sbr.rel (%p253) target = $region12
      $region11: #{tpu_custom_call.1} parent=5 // pred_region
        %s257 = ssub.s32 %s18, 1
        // Predicated region
        $region13: #{tpu_custom_call.1} parent=11 // pred_check
          %p258 = pneg %p91
        $region14: #{tpu_custom_call.1} parent=11 // pred_check_branch
          %260 = sbr.rel (%p258) target = $region16
        $region15: #{tpu_custom_call.1} parent=11 // pred_region
          _
        $region16: #{tpu_custom_call.1} parent=11 // pred_fallthru
          _
        // Predicated region
        $region17: #{tpu_custom_call.1} parent=11 // pred_check
          %p261 = pneg %p112
        $region18: #{tpu_custom_call.1} parent=11 // pred_check_branch
          %263 = sbr.rel (%p261) target = $region20
        $region19: #{tpu_custom_call.1} parent=11 // pred_region
          _
        $region20: #{tpu_custom_call.1} parent=11 // pred_fallthru
          _
        // Predicated region
        $region21: #{tpu_custom_call.1} parent=11 // pred_check
          %p264 = pneg %p133
        $region22: #{tpu_custom_call.1} parent=11 // pred_check_branch
          %266 = sbr.rel (%p264) target = $region24
        $region23: #{tpu_custom_call.1} parent=11 // pred_region
          _
        $region24: #{tpu_custom_call.1} parent=11 // pred_fallthru
          _
        // Predicated region
        $region25: #{tpu_custom_call.1} parent=11 // pred_check
          %p267 = pneg %p154
        $region26: #{tpu_custom_call.1} parent=11 // pred_check_branch
          %269 = sbr.rel (%p267) target = $region28
        $region27: #{tpu_custom_call.1} parent=11 // pred_region
          _
        $region28: #{tpu_custom_call.1} parent=11 // pred_fallthru
          _
        // Predicated region
        $region29: #{tpu_custom_call.1} parent=11 // pred_check
          %p270 = pneg %p175
        $region30: #{tpu_custom_call.1} parent=11 // pred_check_branch
          %272 = sbr.rel (%p270) target = $region32
        $region31: #{tpu_custom_call.1} parent=11 // pred_region
          _
        $region32: #{tpu_custom_call.1} parent=11 // pred_fallthru
          _
        // Predicated region
        $region33: #{tpu_custom_call.1} parent=11 // pred_check
          %p273 = pneg %p196
        $region34: #{tpu_custom_call.1} parent=11 // pred_check_branch
          %275 = sbr.rel (%p273) target = $region36
        $region35: #{tpu_custom_call.1} parent=11 // pred_region
          _
        $region36: #{tpu_custom_call.1} parent=11 // pred_fallthru
          _
        // Predicated region
        $region37: #{tpu_custom_call.1} parent=11 // pred_check
          %p276 = pneg %p217
        $region38: #{tpu_custom_call.1} parent=11 // pred_check_branch
          %278 = sbr.rel (%p276) target = $region40
        $region39: #{tpu_custom_call.1} parent=11 // pred_region
          _
        $region40: #{tpu_custom_call.1} parent=11 // pred_fallthru
          _
      $region12: #{tpu_custom_call.1} parent=5 // pred_fallthru
        _
      %p279 = scmp.lt.s32.totalorder %s18, 2
      // Predicated region
      $region41: #{tpu_custom_call.1} parent=5 // pred_check
        %p280 = pneg %p279
      $region42: #{tpu_custom_call.1} parent=5 // pred_check_branch
        %282 = sbr.rel (%p280) target = $region44
      $region43: #{tpu_custom_call.1} parent=5 // pred_region
        // Predicated region
        $region45: #{tpu_custom_call.1} parent=43 // pred_check
          %p283 = pneg %p38
        $region46: #{tpu_custom_call.1} parent=43 // pred_check_branch
          %285 = sbr.rel (%p283) target = $region48
        $region47: #{tpu_custom_call.1} parent=43 // pred_region
          %s286 = smul.u32 16, %s18
          %p287 = scmp.lt.s32.totalorder %s286, 31
          %s288 = scalar_select %p287, %s286, 31
          %s289 = smul.addr %s288, 4
          %s290 = scalar_lea.vmem %s0, %s289
          %s291 = smul.u32 16, %s18
        $region48: #{tpu_custom_call.1} parent=43 // pred_fallthru
          _
        // Predicated region
        $region49: #{tpu_custom_call.1} parent=43 // pred_check
          %p292 = pneg %p64
        $region50: #{tpu_custom_call.1} parent=43 // pred_check_branch
          %294 = sbr.rel (%p292) target = $region52
        $region51: #{tpu_custom_call.1} parent=43 // pred_region
          %s295 = smul.u32 16, %s18
          %p296 = scmp.lt.s32.totalorder %s295, 31
          %s297 = scalar_select %p296, %s295, 31
          %s298 = smul.addr %s297, 4
          %s299 = scalar_lea.vmem %s1, %s298
          %s300 = smul.u32 16, %s18
        $region52: #{tpu_custom_call.1} parent=43 // pred_fallthru
          _
      $region44: #{tpu_custom_call.1} parent=5 // pred_fallthru
        _
      %p301 = scmp.le.s32.totalorder 1, %s18
      %p302 = scmp.lt.s32.totalorder %s18, 3
      %p303 = pnand %p301, %p302
      %p304 = pneg %p303
      // Predicated region
      $region53: #{tpu_custom_call.1} parent=5 // pred_check
        _
      $region54: #{tpu_custom_call.1} parent=5 // pred_check_branch
        %306 = sbr.rel (%p303) target = $region56
      $region55: #{tpu_custom_call.1} parent=5 // pred_region
        %s307 = ssub.s32 %s18, 1
        %s308 = smul.u32 16, %s23
        %p309 = scmp.lt.s32.totalorder %s308, 31
        %s310 = scalar_select %p309, %s308, 31
        %s311 = smul.addr %s310, 4
        %s312 = scalar_lea.vmem %s0, %s311
        %p313 = pneg %p44
        %p314 = pneg %p41
        %s315 = smul.u32 16, %s23
        %p316 = scmp.lt.s32.totalorder %s315, 31
        %s317 = scalar_select %p316, %s315, 31
        %s318 = smul.addr %s317, 4
        %s319 = scalar_lea.vmem %s1, %s318
        %p320 = pneg %p70
        %p321 = pneg %p67
        %p322 = pneg %p91
        %p323 = pneg %p88
        %p324 = pneg %p112
        %p325 = pneg %p109
        %p326 = pneg %p133
        %p327 = pneg %p130
        %p328 = pneg %p154
        %p329 = pneg %p151
        %p330 = pneg %p175
        %p331 = pneg %p172
        %p332 = pneg %p196
        %p333 = pneg %p193
        %p334 = pneg %p217
        %p335 = pneg %p214
        %p336 = pneg %p243
        %p337 = pneg %p240
        %s338 = sand.u32 %s230, 1
        %s339 = scalar_lea.sflag [#allocation3], %s338
        %s340 = sand.u32 %s230, 1
        %s341 = smul.addr %s340, 64
        %s342 = scalar_lea.vmem [#allocation2], %s341
        %s343 = smul.u32 16, %s23
        %p344 = scmp.lt.s32.totalorder %s343, 31
        %s345 = scalar_select %p344, %s343, 31
        %s346 = smul.addr %s345, 4
        %s347 = scalar_lea.vmem %s0, %s346
        %s348 = smul.u32 16, %s23
        %s349 = smul.u32 16, %s23
        %p350 = scmp.lt.s32.totalorder %s349, 31
        %s351 = scalar_select %p350, %s349, 31
        %s352 = smul.addr %s351, 4
        %s353 = scalar_lea.vmem %s1, %s352
        %s354 = smul.u32 16, %s23
        %s355 = smul.u32 16, %s23
        %v357 = vld [vmem:[%s347] sm:$0xf]
        %v358 = vld [vmem:[%s347 + $0x4] sm:$0xf]
        %v359 = vld [vmem:[%s347 + $0x8] sm:$0xf]
        %v360 = vld [vmem:[%s347 + $0xc] sm:$0xf]
        %v361 = vld [vmem:[%s347 + $0x10] sm:$0xf]
        %v362 = vld [vmem:[%s347 + $0x14] sm:$0xf]
        %v363 = vld [vmem:[%s347 + $0x18] sm:$0xf]
        %v364 = vld [vmem:[%s347 + $0x1c] sm:$0xf]
        %v365 = vld [vmem:[%s347 + $0x20] sm:$0xf]
        %v366 = vld [vmem:[%s347 + $0x24] sm:$0xf]
        %v367 = vld [vmem:[%s347 + $0x28] sm:$0xf]
        %v368 = vld [vmem:[%s347 + $0x2c] sm:$0xf]
        %v369 = vld [vmem:[%s347 + $0x30] sm:$0xf]
        %v370 = vld [vmem:[%s347 + $0x34] sm:$0xf]
        %v371 = vld [vmem:[%s347 + $0x38] sm:$0xf]
        %v372 = vld [vmem:[%s347 + $0x3c] sm:$0xf]
        %v373 = vld [vmem:[%s2] sm:$0xf]
        %v374 = vld [vmem:[%s2 + $0x4] sm:$0xf]
        %v375 = vld [vmem:[%s353] sm:$0xf]
        %v376 = vld [vmem:[%s353 + $0x4] sm:$0xf]
        %v377 = vld [vmem:[%s353 + $0x8] sm:$0xf]
        %v378 = vld [vmem:[%s353 + $0xc] sm:$0xf]
        %v379 = vld [vmem:[%s353 + $0x10] sm:$0xf]
        %v380 = vld [vmem:[%s353 + $0x14] sm:$0xf]
        %v381 = vld [vmem:[%s353 + $0x18] sm:$0xf]
        %v382 = vld [vmem:[%s353 + $0x1c] sm:$0xf]
        %v383 = vld [vmem:[%s353 + $0x20] sm:$0xf]
        %v384 = vld [vmem:[%s353 + $0x24] sm:$0xf]
        %v385 = vld [vmem:[%s353 + $0x28] sm:$0xf]
        %v386 = vld [vmem:[%s353 + $0x2c] sm:$0xf]
        %v387 = vld [vmem:[%s353 + $0x30] sm:$0xf]
        %v388 = vld [vmem:[%s353 + $0x34] sm:$0xf]
        %v389 = vld [vmem:[%s353 + $0x38] sm:$0xf]
        %v390 = vld [vmem:[%s353 + $0x3c] sm:$0xf]
        %v391 = vld [vmem:[%s3] sm:$0xf]
        %v392 = vld [vmem:[%s3 + $0x4] sm:$0xf]
        %v409 = vunpack.c.l.b16 %v375
        %v410 = vunpack.c.l.b16 %v376
        %v411 = vunpack.c.l.b16 %v377
        %v412 = vunpack.c.l.b16 %v378
        %v413 = vunpack.c.l.b16 %v379
        %v414 = vunpack.c.l.b16 %v380
        %v415 = vunpack.c.l.b16 %v381
        %v416 = vunpack.c.l.b16 %v382
        %v417 = vunpack.c.l.b16 %v383
        %v418 = vunpack.c.l.b16 %v384
        %v419 = vunpack.c.l.b16 %v385
        %v420 = vunpack.c.l.b16 %v386
        %v421 = vunpack.c.l.b16 %v387
        %v422 = vunpack.c.l.b16 %v388
        %v423 = vunpack.c.l.b16 %v389
        %v424 = vunpack.c.l.b16 %v390
        %v425 = vpack.c.b16 %v410, %v409
        %v426 = vpack.c.b16 %v412, %v411
        %v427 = vpack.c.b16 %v414, %v413
        %v428 = vpack.c.b16 %v416, %v415
        %v429 = vpack.c.b16 %v418, %v417
        %v430 = vpack.c.b16 %v420, %v419
        %v431 = vpack.c.b16 %v422, %v421
        %v432 = vpack.c.b16 %v424, %v423
        %v435 = vunpack.c.l.b16 %v391
        %v436 = vunpack.c.l.b16 %v392
        %v437 = vpack.c.b16 %v436, %v435
        %vm439 = vcmask 130048
        %v441 = vsel %vm439, %v425, 0
        %v444 = vsel %vm439, %v426, 0
        %v447 = vsel %vm439, %v427, 0
        %v450 = vsel %vm439, %v428, 0
        %v453 = vsel %vm439, %v429, 0
        %v456 = vsel %vm439, %v430, 0
        %v459 = vsel %vm439, %v431, 0
        %v462 = vsel %vm439, %v432, 0
        %464 = vmatprep.subr.bf16.mxu0 0
        %465 = vmatpush1.bf16.msra.mxu0 %v437
        %466 = vmatprep.subr.bf16.mxu0 0
        %467 = vmatpush1.bf16.msra.mxu0 0
        %468 = vmatprep.subr.bf16.mxu0 0
        %469 = vmatpush1.bf16.msra.mxu0 0
        %470 = vmatprep.subr.bf16.mxu0 0
        %471 = vmatpush1.bf16.msra.mxu0 0
        %472 = vmatprep.subr.bf16.mxu0 0
        %473 = vmatpush1.bf16.msra.mxu0 0
        %474 = vmatprep.subr.bf16.mxu0 0
        %475 = vmatpush1.bf16.msra.mxu0 0
        %476 = vmatprep.subr.bf16.mxu0 0
        %477 = vmatpush1.bf16.msra.mxu0 0
        %478 = vmatprep.subr.bf16.mxu0 0
        %479 = vmatpush1.bf16.msra.mxu0 0
        %480 = vmatprep.subr.bf16.mxu0 0
        %481 = vmatpush1.bf16.msra.mxu0 0
        %482 = vmatprep.subr.bf16.mxu0 0
        %483 = vmatpush1.bf16.msra.mxu0 0
        %484 = vmatprep.subr.bf16.mxu0 0
        %485 = vmatpush1.bf16.msra.mxu0 0
        %486 = vmatprep.subr.bf16.mxu0 0
        %487 = vmatpush1.bf16.msra.mxu0 0
        %488 = vmatprep.subr.bf16.mxu0 0
        %489 = vmatpush1.bf16.msra.mxu0 0
        %490 = vmatprep.subr.bf16.mxu0 0
        %491 = vmatpush1.bf16.msra.mxu0 0
        %492 = vmatprep.subr.bf16.mxu0 0
        %493 = vmatpush1.bf16.msra.mxu0 0
        %494 = vmatprep.subr.bf16.mxu0 0
        %495 = vmatpush1.bf16.msra.mxu0 0
        %496 = vmatprep.mubr.bf16.mxu0 0
        %497 = vmatmul.mubr.bf16.gmra.mrb[0].mxu0 %v441
        %v498 = vpop.f32.mrb[0].mxu0
        %v499 = vadd.f32 0.0, %v498
        %v500 = vpop.f32.mrb[0].mxu0
        %v501 = vpop.f32.mrb[0].mxu0
        %v502 = vadd.f32 0.0, %v501
        %v503 = vpop.f32.mrb[0].mxu0
        %504 = vmatprep.mubr.bf16.mxu0 0
        %505 = vmatmul.mubr.bf16.gmra.mrb[0].mxu0 %v444
        %v506 = vpop.f32.mrb[0].mxu0
        %v507 = vadd.f32 0.0, %v506
        %v508 = vpop.f32.mrb[0].mxu0
        %v509 = vpop.f32.mrb[0].mxu0
        %v510 = vadd.f32 0.0, %v509
        %v511 = vpop.f32.mrb[0].mxu0
        %512 = vmatprep.mubr.bf16.mxu0 0
        %513 = vmatmul.mubr.bf16.gmra.mrb[0].mxu0 %v447
        %v514 = vpop.f32.mrb[0].mxu0
        %v515 = vadd.f32 0.0, %v514
        %v516 = vpop.f32.mrb[0].mxu0
        %v517 = vpop.f32.mrb[0].mxu0
        %v518 = vadd.f32 0.0, %v517
        %v519 = vpop.f32.mrb[0].mxu0
        %520 = vmatprep.mubr.bf16.mxu0 0
        %521 = vmatmul.mubr.bf16.gmra.mrb[0].mxu0 %v450
        %v522 = vpop.f32.mrb[0].mxu0
        %v523 = vadd.f32 0.0, %v522
        %v524 = vpop.f32.mrb[0].mxu0
        %v525 = vpop.f32.mrb[0].mxu0
        %v526 = vadd.f32 0.0, %v525
        %v527 = vpop.f32.mrb[0].mxu0
        %528 = vmatprep.mubr.bf16.mxu0 0
        %529 = vmatmul.mubr.bf16.gmra.mrb[0].mxu0 %v453
        %v530 = vpop.f32.mrb[0].mxu0
        %v531 = vadd.f32 0.0, %v530
        %v532 = vpop.f32.mrb[0].mxu0
        %v533 = vpop.f32.mrb[0].mxu0
        %v534 = vadd.f32 0.0, %v533
        %v535 = vpop.f32.mrb[0].mxu0
        %536 = vmatprep.mubr.bf16.mxu0 0
        %537 = vmatmul.mubr.bf16.gmra.mrb[0].mxu0 %v456
        %v538 = vpop.f32.mrb[0].mxu0
        %v539 = vadd.f32 0.0, %v538
        %v540 = vpop.f32.mrb[0].mxu0
        %v541 = vpop.f32.mrb[0].mxu0
        %v542 = vadd.f32 0.0, %v541
        %v543 = vpop.f32.mrb[0].mxu0
        %544 = vmatprep.mubr.bf16.mxu0 0
        %545 = vmatmul.mubr.bf16.gmra.mrb[0].mxu0 %v459
        %v546 = vpop.f32.mrb[0].mxu0
        %v547 = vadd.f32 0.0, %v546
        %v548 = vpop.f32.mrb[0].mxu0
        %v549 = vpop.f32.mrb[0].mxu0
        %v550 = vadd.f32 0.0, %v549
        %v551 = vpop.f32.mrb[0].mxu0
        %552 = vmatprep.mubr.bf16.mxu0 0
        %553 = vmatmul.mubr.bf16.gmra.mrb[0].mxu0 %v462
        %v554 = vpop.f32.mrb[0].mxu0
        %v555 = vadd.f32 0.0, %v554
        %v556 = vpop.f32.mrb[0].mxu0
        %v557 = vpop.f32.mrb[0].mxu0
        %v558 = vadd.f32 0.0, %v557
        %v559 = vpop.f32.mrb[0].mxu0
        %560 = vdwg.mxu0
        %v577 = vunpack.c.l.b16 %v357
        %v578 = vunpack.c.l.b16 %v358
        %v579 = vunpack.c.l.b16 %v359
        %v580 = vunpack.c.l.b16 %v360
        %v581 = vunpack.c.l.b16 %v361
        %v582 = vunpack.c.l.b16 %v362
        %v583 = vunpack.c.l.b16 %v363
        %v584 = vunpack.c.l.b16 %v364
        %v585 = vunpack.c.l.b16 %v365
        %v586 = vunpack.c.l.b16 %v366
        %v587 = vunpack.c.l.b16 %v367
        %v588 = vunpack.c.l.b16 %v368
        %v589 = vunpack.c.l.b16 %v369
        %v590 = vunpack.c.l.b16 %v370
        %v591 = vunpack.c.l.b16 %v371
        %v592 = vunpack.c.l.b16 %v372
        %v593 = vpack.c.b16 %v578, %v577
        %v594 = vpack.c.b16 %v580, %v579
        %v595 = vpack.c.b16 %v582, %v581
        %v596 = vpack.c.b16 %v584, %v583
        %v597 = vpack.c.b16 %v586, %v585
        %v598 = vpack.c.b16 %v588, %v587
        %v599 = vpack.c.b16 %v590, %v589
        %v600 = vpack.c.b16 %v592, %v591
        %v603 = vunpack.c.l.b16 %v373
        %v604 = vunpack.c.l.b16 %v374
        %v605 = vpack.c.b16 %v604, %v603
        %v608 = vsel %vm439, %v593, 0
        %v611 = vsel %vm439, %v594, 0
        %v614 = vsel %vm439, %v595, 0
        %v617 = vsel %vm439, %v596, 0
        %v620 = vsel %vm439, %v597, 0
        %v623 = vsel %vm439, %v598, 0
        %v626 = vsel %vm439, %v599, 0
        %v629 = vsel %vm439, %v600, 0
        %631 = vmatprep.subr.bf16.mxu0 0
        %632 = vmatpush1.bf16.msra.mxu0 %v605
        %633 = vmatprep.subr.bf16.mxu0 0
        %634 = vmatpush1.bf16.msra.mxu0 0
        %635 = vmatprep.subr.bf16.mxu0 0
        %636 = vmatpush1.bf16.msra.mxu0 0
        %637 = vmatprep.subr.bf16.mxu0 0
        %638 = vmatpush1.bf16.msra.mxu0 0
        %639 = vmatprep.subr.bf16.mxu0 0
        %640 = vmatpush1.bf16.msra.mxu0 0
        %641 = vmatprep.subr.bf16.mxu0 0
        %642 = vmatpush1.bf16.msra.mxu0 0
        %643 = vmatprep.subr.bf16.mxu0 0
        %644 = vmatpush1.bf16.msra.mxu0 0
        %645 = vmatprep.subr.bf16.mxu0 0
        %646 = vmatpush1.bf16.msra.mxu0 0
        %647 = vmatprep.subr.bf16.mxu0 0
        %648 = vmatpush1.bf16.msra.mxu0 0
        %649 = vmatprep.subr.bf16.mxu0 0
        %650 = vmatpush1.bf16.msra.mxu0 0
        %651 = vmatprep.subr.bf16.mxu0 0
        %652 = vmatpush1.bf16.msra.mxu0 0
        %653 = vmatprep.subr.bf16.mxu0 0
        %654 = vmatpush1.bf16.msra.mxu0 0
        %655 = vmatprep.subr.bf16.mxu0 0
        %656 = vmatpush1.bf16.msra.mxu0 0
        %657 = vmatprep.subr.bf16.mxu0 0
        %658 = vmatpush1.bf16.msra.mxu0 0
        %659 = vmatprep.subr.bf16.mxu0 0
        %660 = vmatpush1.bf16.msra.mxu0 0
        %661 = vmatprep.subr.bf16.mxu0 0
        %662 = vmatpush1.bf16.msra.mxu0 0
        %663 = vmatprep.mubr.bf16.mxu0 0
        %664 = vmatmul.mubr.bf16.gmra.mrb[0].mxu0 %v608
        %v665 = vpop.f32.mrb[0].mxu0
        %v666 = vadd.f32 %v499, %v665
        %v667 = vpop.f32.mrb[0].mxu0
        %v668 = vpop.f32.mrb[0].mxu0
        %v669 = vadd.f32 %v502, %v668
        %v670 = vpop.f32.mrb[0].mxu0
        %671 = vmatprep.mubr.bf16.mxu0 0
        %672 = vmatmul.mubr.bf16.gmra.mrb[0].mxu0 %v611
        %v673 = vpop.f32.mrb[0].mxu0
        %v674 = vadd.f32 %v507, %v673
        %v675 = vpop.f32.mrb[0].mxu0
        %v676 = vpop.f32.mrb[0].mxu0
        %v677 = vadd.f32 %v510, %v676
        %v678 = vpop.f32.mrb[0].mxu0
        %679 = vmatprep.mubr.bf16.mxu0 0
        %680 = vmatmul.mubr.bf16.gmra.mrb[0].mxu0 %v614
        %v681 = vpop.f32.mrb[0].mxu0
        %v682 = vadd.f32 %v515, %v681
        %v683 = vpop.f32.mrb[0].mxu0
        %v684 = vpop.f32.mrb[0].mxu0
        %v685 = vadd.f32 %v518, %v684
        %v686 = vpop.f32.mrb[0].mxu0
        %687 = vmatprep.mubr.bf16.mxu0 0
        %688 = vmatmul.mubr.bf16.gmra.mrb[0].mxu0 %v617
        %v689 = vpop.f32.mrb[0].mxu0
        %v690 = vadd.f32 %v523, %v689
        %v691 = vpop.f32.mrb[0].mxu0
        %v692 = vpop.f32.mrb[0].mxu0
        %v693 = vadd.f32 %v526, %v692
        %v694 = vpop.f32.mrb[0].mxu0
        %695 = vmatprep.mubr.bf16.mxu0 0
        %696 = vmatmul.mubr.bf16.gmra.mrb[0].mxu0 %v620
        %v697 = vpop.f32.mrb[0].mxu0
        %v698 = vadd.f32 %v531, %v697
        %v699 = vpop.f32.mrb[0].mxu0
        %v700 = vpop.f32.mrb[0].mxu0
        %v701 = vadd.f32 %v534, %v700
        %v702 = vpop.f32.mrb[0].mxu0
        %703 = vmatprep.mubr.bf16.mxu0 0
        %704 = vmatmul.mubr.bf16.gmra.mrb[0].mxu0 %v623
        %v705 = vpop.f32.mrb[0].mxu0
        %v706 = vadd.f32 %v539, %v705
        %v707 = vpop.f32.mrb[0].mxu0
        %v708 = vpop.f32.mrb[0].mxu0
        %v709 = vadd.f32 %v542, %v708
        %v710 = vpop.f32.mrb[0].mxu0
        %711 = vmatprep.mubr.bf16.mxu0 0
        %712 = vmatmul.mubr.bf16.gmra.mrb[0].mxu0 %v626
        %v713 = vpop.f32.mrb[0].mxu0
        %v714 = vadd.f32 %v547, %v713
        %v715 = vpop.f32.mrb[0].mxu0
        %v716 = vpop.f32.mrb[0].mxu0
        %v717 = vadd.f32 %v550, %v716
        %v718 = vpop.f32.mrb[0].mxu0
        %719 = vmatprep.mubr.bf16.mxu0 0
        %720 = vmatmul.mubr.bf16.gmra.mrb[0].mxu0 %v629
        %v721 = vpop.f32.mrb[0].mxu0
        %v722 = vadd.f32 %v555, %v721
        %v723 = vpop.f32.mrb[0].mxu0
        %v724 = vpop.f32.mrb[0].mxu0
        %v725 = vadd.f32 %v558, %v724
        %v726 = vpop.f32.mrb[0].mxu0
        %727 = vdwg.mxu0
        %v728 = vld [vmem:[%s4] sm:$0x1]
        %v730 = vlaneseq
        %v731 = vshrl.u32 %v730, 7
        %v732 = vsub.s32 0, %v731
        %v733 = vrot.slane %v728, %v732
        %v735 = vadd.f32 %v666, %v733
        %v736 = vadd.f32 %v669, %v733
        %v737 = vadd.f32 %v674, %v733
        %v738 = vadd.f32 %v677, %v733
        %v739 = vadd.f32 %v682, %v733
        %v740 = vadd.f32 %v685, %v733
        %v741 = vadd.f32 %v690, %v733
        %v742 = vadd.f32 %v693, %v733
        %v743 = vadd.f32 %v698, %v733
        %v744 = vadd.f32 %v701, %v733
        %v745 = vadd.f32 %v706, %v733
        %v746 = vadd.f32 %v709, %v733
        %v747 = vadd.f32 %v714, %v733
        %v748 = vadd.f32 %v717, %v733
        %v749 = vadd.f32 %v722, %v733
        %v750 = vadd.f32 %v725, %v733
        %v751 = vmax.f32 %v735, 0.0
        %v752 = vmax.f32 %v736, 0.0
        %v753 = vmax.f32 %v737, 0.0
        %v754 = vmax.f32 %v738, 0.0
        %v755 = vmax.f32 %v739, 0.0
        %v756 = vmax.f32 %v740, 0.0
        %v757 = vmax.f32 %v741, 0.0
        %v758 = vmax.f32 %v742, 0.0
        %v759 = vmax.f32 %v743, 0.0
        %v760 = vmax.f32 %v744, 0.0
        %v761 = vmax.f32 %v745, 0.0
        %v762 = vmax.f32 %v746, 0.0
        %v763 = vmax.f32 %v747, 0.0
        %v764 = vmax.f32 %v748, 0.0
        %v765 = vmax.f32 %v749, 0.0
        %v766 = vmax.f32 %v750, 0.0
        %v767 = vld [vmem:[%s5] sm:$0xf]
        %v768 = vld [vmem:[%s5 + $0x4] sm:$0xf]
        %v769 = vld [vmem:[%s5 + $0x8] sm:$0xf]
        %v770 = vld [vmem:[%s5 + $0xc] sm:$0xf]
        %v771 = vld [vmem:[%s5 + $0x10] sm:$0xf]
        %v772 = vld [vmem:[%s5 + $0x14] sm:$0xf]
        %v773 = vld [vmem:[%s5 + $0x18] sm:$0xf]
        %v774 = vld [vmem:[%s5 + $0x1c] sm:$0xf]
        %v775 = vld [vmem:[%s5 + $0x20] sm:$0xf]
        %v776 = vld [vmem:[%s5 + $0x24] sm:$0xf]
        %v777 = vld [vmem:[%s5 + $0x28] sm:$0xf]
        %v778 = vld [vmem:[%s5 + $0x2c] sm:$0xf]
        %v779 = vld [vmem:[%s5 + $0x30] sm:$0xf]
        %v780 = vld [vmem:[%s5 + $0x34] sm:$0xf]
        %v781 = vld [vmem:[%s5 + $0x38] sm:$0xf]
        %v782 = vld [vmem:[%s5 + $0x3c] sm:$0xf]
        %v783 = vld [vmem:[%s6] sm:$0x1]
        %v784 = vpack.c.bf16 %v752, %v751
        %v785 = vpack.c.bf16 %v754, %v753
        %v786 = vpack.c.bf16 %v756, %v755
        %v787 = vpack.c.bf16 %v758, %v757
        %v788 = vpack.c.bf16 %v760, %v759
        %v789 = vpack.c.bf16 %v762, %v761
        %v790 = vpack.c.bf16 %v764, %v763
        %v791 = vpack.c.bf16 %v766, %v765
        %v793 = vlaneseq
        %v794 = vshrl.u32 %v793, 7
        %v795 = vsub.s32 0, %v794
        %v796 = vrot.slane %v783, %v795
        %v814 = vunpack.c.l.b16 %v767
        %v815 = vunpack.c.l.b16 %v768
        %v816 = vunpack.c.l.b16 %v769
        %v817 = vunpack.c.l.b16 %v770
        %v818 = vunpack.c.l.b16 %v771
        %v819 = vunpack.c.l.b16 %v772
        %v820 = vunpack.c.l.b16 %v773
        %v821 = vunpack.c.l.b16 %v774
        %v822 = vunpack.c.l.b16 %v775
        %v823 = vunpack.c.l.b16 %v776
        %v824 = vunpack.c.l.b16 %v777
        %v825 = vunpack.c.l.b16 %v778
        %v826 = vunpack.c.l.b16 %v779
        %v827 = vunpack.c.l.b16 %v780
        %v828 = vunpack.c.l.b16 %v781
        %v829 = vunpack.c.l.b16 %v782
        %v830 = vpack.c.b16 %v815, %v814
        %v831 = vpack.c.b16 %v817, %v816
        %v832 = vpack.c.b16 %v819, %v818
        %v833 = vpack.c.b16 %v821, %v820
        %v834 = vpack.c.b16 %v823, %v822
        %v835 = vpack.c.b16 %v825, %v824
        %v836 = vpack.c.b16 %v827, %v826
        %v837 = vpack.c.b16 %v829, %v828
        %846 = vmatprep.subr.bf16.mxu0 0
        %847 = vmatpush1.bf16.msra.mxu0 %v830
        %848 = vmatprep.subr.bf16.mxu0 0
        %849 = vmatpush1.bf16.msra.mxu0 %v831
        %850 = vmatprep.subr.bf16.mxu0 0
        %851 = vmatpush1.bf16.msra.mxu0 %v832
        %852 = vmatprep.subr.bf16.mxu0 0
        %853 = vmatpush1.bf16.msra.mxu0 %v833
        %854 = vmatprep.subr.bf16.mxu0 0
        %855 = vmatpush1.bf16.msra.mxu0 %v834
        %856 = vmatprep.subr.bf16.mxu0 0
        %857 = vmatpush1.bf16.msra.mxu0 %v835
        %858 = vmatprep.subr.bf16.mxu0 0
        %859 = vmatpush1.bf16.msra.mxu0 %v836
        %860 = vmatprep.subr.bf16.mxu0 0
        %861 = vmatpush1.bf16.msra.mxu0 %v837
        %862 = vmatprep.subr.bf16.mxu0 0
        %863 = vmatpush1.bf16.msra.mxu0 0
        %864 = vmatprep.subr.bf16.mxu0 0
        %865 = vmatpush1.bf16.msra.mxu0 0
        %866 = vmatprep.subr.bf16.mxu0 0
        %867 = vmatpush1.bf16.msra.mxu0 0
        %868 = vmatprep.subr.bf16.mxu0 0
        %869 = vmatpush1.bf16.msra.mxu0 0
        %870 = vmatprep.subr.bf16.mxu0 0
        %871 = vmatpush1.bf16.msra.mxu0 0
        %872 = vmatprep.subr.bf16.mxu0 0
        %873 = vmatpush1.bf16.msra.mxu0 0
        %874 = vmatprep.subr.bf16.mxu0 0
        %875 = vmatpush1.bf16.msra.mxu0 0
        %876 = vmatprep.subr.bf16.mxu0 0
        %877 = vmatpush1.bf16.msra.mxu0 0
        %878 = vmatprep.mubr.bf16.mxu0 0
        %879 = vmatmul.mubr.bf16.gmra.mrb[0].mxu0 %v784
        %v880 = vpop.f32.mrb[0].mxu0
        %v881 = vadd.f32 %v796, %v880
        %v882 = vpop.f32.mrb[0].mxu0
        %v883 = vpop.f32.mrb[0].mxu0
        %v884 = vadd.f32 %v796, %v883
        %v885 = vpop.f32.mrb[0].mxu0
        %886 = vmatprep.mubr.bf16.mxu0 0
        %887 = vmatmul.mubr.bf16.gmra.mrb[0].mxu0 %v785
        %v888 = vpop.f32.mrb[0].mxu0
        %v889 = vadd.f32 %v796, %v888
        %v890 = vpop.f32.mrb[0].mxu0
        %v891 = vpop.f32.mrb[0].mxu0
        %v892 = vadd.f32 %v796, %v891
        %v893 = vpop.f32.mrb[0].mxu0
        %894 = vmatprep.mubr.bf16.mxu0 0
        %895 = vmatmul.mubr.bf16.gmra.mrb[0].mxu0 %v786
        %v896 = vpop.f32.mrb[0].mxu0
        %v897 = vadd.f32 %v796, %v896
        %v898 = vpop.f32.mrb[0].mxu0
        %v899 = vpop.f32.mrb[0].mxu0
        %v900 = vadd.f32 %v796, %v899
        %v901 = vpop.f32.mrb[0].mxu0
        %902 = vmatprep.mubr.bf16.mxu0 0
        %903 = vmatmul.mubr.bf16.gmra.mrb[0].mxu0 %v787
        %v904 = vpop.f32.mrb[0].mxu0
        %v905 = vadd.f32 %v796, %v904
        %v906 = vpop.f32.mrb[0].mxu0
        %v907 = vpop.f32.mrb[0].mxu0
        %v908 = vadd.f32 %v796, %v907
        %v909 = vpop.f32.mrb[0].mxu0
        %910 = vmatprep.mubr.bf16.mxu0 0
        %911 = vmatmul.mubr.bf16.gmra.mrb[0].mxu0 %v788
        %v912 = vpop.f32.mrb[0].mxu0
        %v913 = vadd.f32 %v796, %v912
        %v914 = vpop.f32.mrb[0].mxu0
        %v915 = vpop.f32.mrb[0].mxu0
        %v916 = vadd.f32 %v796, %v915
        %v917 = vpop.f32.mrb[0].mxu0
        %918 = vmatprep.mubr.bf16.mxu0 0
        %919 = vmatmul.mubr.bf16.gmra.mrb[0].mxu0 %v789
        %v920 = vpop.f32.mrb[0].mxu0
        %v921 = vadd.f32 %v796, %v920
        %v922 = vpop.f32.mrb[0].mxu0
        %v923 = vpop.f32.mrb[0].mxu0
        %v924 = vadd.f32 %v796, %v923
        %v925 = vpop.f32.mrb[0].mxu0
        %926 = vmatprep.mubr.bf16.mxu0 0
        %927 = vmatmul.mubr.bf16.gmra.mrb[0].mxu0 %v790
        %v928 = vpop.f32.mrb[0].mxu0
        %v929 = vadd.f32 %v796, %v928
        %v930 = vpop.f32.mrb[0].mxu0
        %v931 = vpop.f32.mrb[0].mxu0
        %v932 = vadd.f32 %v796, %v931
        %v933 = vpop.f32.mrb[0].mxu0
        %934 = vmatprep.mubr.bf16.mxu0 0
        %935 = vmatmul.mubr.bf16.gmra.mrb[0].mxu0 %v791
        %v936 = vpop.f32.mrb[0].mxu0
        %v937 = vadd.f32 %v796, %v936
        %v938 = vpop.f32.mrb[0].mxu0
        %v939 = vpop.f32.mrb[0].mxu0
        %v940 = vadd.f32 %v796, %v939
        %v941 = vpop.f32.mrb[0].mxu0
        %942 = vdwg.mxu0
        %v943 = vmax.f32 %v881, 0.0
        %v944 = vmax.f32 %v884, 0.0
        %v945 = vmax.f32 %v889, 0.0
        %v946 = vmax.f32 %v892, 0.0
        %v947 = vmax.f32 %v897, 0.0
        %v948 = vmax.f32 %v900, 0.0
        %v949 = vmax.f32 %v905, 0.0
        %v950 = vmax.f32 %v908, 0.0
        %v951 = vmax.f32 %v913, 0.0
        %v952 = vmax.f32 %v916, 0.0
        %v953 = vmax.f32 %v921, 0.0
        %v954 = vmax.f32 %v924, 0.0
        %v955 = vmax.f32 %v929, 0.0
        %v956 = vmax.f32 %v932, 0.0
        %v957 = vmax.f32 %v937, 0.0
        %v958 = vmax.f32 %v940, 0.0
        %v959 = vld [vmem:[%s7] sm:$0xf]
        %v960 = vld [vmem:[%s7 + $0x4] sm:$0xf]
        %v961 = vld [vmem:[%s7 + $0x8] sm:$0xf]
        %v962 = vld [vmem:[%s7 + $0xc] sm:$0xf]
        %v963 = vld [vmem:[%s7 + $0x10] sm:$0xf]
        %v964 = vld [vmem:[%s7 + $0x14] sm:$0xf]
        %v965 = vld [vmem:[%s7 + $0x18] sm:$0xf]
        %v966 = vld [vmem:[%s7 + $0x1c] sm:$0xf]
        %v967 = vld [vmem:[%s7 + $0x20] sm:$0xf]
        %v968 = vld [vmem:[%s7 + $0x24] sm:$0xf]
        %v969 = vld [vmem:[%s7 + $0x28] sm:$0xf]
        %v970 = vld [vmem:[%s7 + $0x2c] sm:$0xf]
        %v971 = vld [vmem:[%s7 + $0x30] sm:$0xf]
        %v972 = vld [vmem:[%s7 + $0x34] sm:$0xf]
        %v973 = vld [vmem:[%s7 + $0x38] sm:$0xf]
        %v974 = vld [vmem:[%s7 + $0x3c] sm:$0xf]
        %v975 = vld [vmem:[%s8] sm:$0x1]
        %v976 = vpack.c.bf16 %v944, %v943
        %v977 = vpack.c.bf16 %v946, %v945
        %v978 = vpack.c.bf16 %v948, %v947
        %v979 = vpack.c.bf16 %v950, %v949
        %v980 = vpack.c.bf16 %v952, %v951
        %v981 = vpack.c.bf16 %v954, %v953
        %v982 = vpack.c.bf16 %v956, %v955
        %v983 = vpack.c.bf16 %v958, %v957
        %v985 = vlaneseq
        %v986 = vshrl.u32 %v985, 7
        %v987 = vsub.s32 0, %v986
        %v988 = vrot.slane %v975, %v987
        %v1006 = vunpack.c.l.b16 %v959
        %v1007 = vunpack.c.l.b16 %v960
        %v1008 = vunpack.c.l.b16 %v961
        %v1009 = vunpack.c.l.b16 %v962
        %v1010 = vunpack.c.l.b16 %v963
        %v1011 = vunpack.c.l.b16 %v964
        %v1012 = vunpack.c.l.b16 %v965
        %v1013 = vunpack.c.l.b16 %v966
        %v1014 = vunpack.c.l.b16 %v967
        %v1015 = vunpack.c.l.b16 %v968
        %v1016 = vunpack.c.l.b16 %v969
        %v1017 = vunpack.c.l.b16 %v970
        %v1018 = vunpack.c.l.b16 %v971
        %v1019 = vunpack.c.l.b16 %v972
        %v1020 = vunpack.c.l.b16 %v973
        %v1021 = vunpack.c.l.b16 %v974
        %v1022 = vpack.c.b16 %v1007, %v1006
        %v1023 = vpack.c.b16 %v1009, %v1008
        %v1024 = vpack.c.b16 %v1011, %v1010
        %v1025 = vpack.c.b16 %v1013, %v1012
        %v1026 = vpack.c.b16 %v1015, %v1014
        %v1027 = vpack.c.b16 %v1017, %v1016
        %v1028 = vpack.c.b16 %v1019, %v1018
        %v1029 = vpack.c.b16 %v1021, %v1020
        %1038 = vmatprep.subr.bf16.mxu0 0
        %1039 = vmatpush1.bf16.msra.mxu0 %v1022
        %1040 = vmatprep.subr.bf16.mxu0 0
        %1041 = vmatpush1.bf16.msra.mxu0 %v1023
        %1042 = vmatprep.subr.bf16.mxu0 0
        %1043 = vmatpush1.bf16.msra.mxu0 %v1024
        %1044 = vmatprep.subr.bf16.mxu0 0
        %1045 = vmatpush1.bf16.msra.mxu0 %v1025
        %1046 = vmatprep.subr.bf16.mxu0 0
        %1047 = vmatpush1.bf16.msra.mxu0 %v1026
        %1048 = vmatprep.subr.bf16.mxu0 0
        %1049 = vmatpush1.bf16.msra.mxu0 %v1027
        %1050 = vmatprep.subr.bf16.mxu0 0
        %1051 = vmatpush1.bf16.msra.mxu0 %v1028
        %1052 = vmatprep.subr.bf16.mxu0 0
        %1053 = vmatpush1.bf16.msra.mxu0 %v1029
        %1054 = vmatprep.subr.bf16.mxu0 0
        %1055 = vmatpush1.bf16.msra.mxu0 0
        %1056 = vmatprep.subr.bf16.mxu0 0
        %1057 = vmatpush1.bf16.msra.mxu0 0
        %1058 = vmatprep.subr.bf16.mxu0 0
        %1059 = vmatpush1.bf16.msra.mxu0 0
        %1060 = vmatprep.subr.bf16.mxu0 0
        %1061 = vmatpush1.bf16.msra.mxu0 0
        %1062 = vmatprep.subr.bf16.mxu0 0
        %1063 = vmatpush1.bf16.msra.mxu0 0
        %1064 = vmatprep.subr.bf16.mxu0 0
        %1065 = vmatpush1.bf16.msra.mxu0 0
        %1066 = vmatprep.subr.bf16.mxu0 0
        %1067 = vmatpush1.bf16.msra.mxu0 0
        %1068 = vmatprep.subr.bf16.mxu0 0
        %1069 = vmatpush1.bf16.msra.mxu0 0
        %1070 = vmatprep.mubr.bf16.mxu0 0
        %1071 = vmatmul.mubr.bf16.gmra.mrb[0].mxu0 %v976
        %v1072 = vpop.f32.mrb[0].mxu0
        %v1073 = vadd.f32 %v988, %v1072
        %v1074 = vpop.f32.mrb[0].mxu0
        %v1075 = vpop.f32.mrb[0].mxu0
        %v1076 = vadd.f32 %v988, %v1075
        %v1077 = vpop.f32.mrb[0].mxu0
        %1078 = vmatprep.mubr.bf16.mxu0 0
        %1079 = vmatmul.mubr.bf16.gmra.mrb[0].mxu0 %v977
        %v1080 = vpop.f32.mrb[0].mxu0
        %v1081 = vadd.f32 %v988, %v1080
        %v1082 = vpop.f32.mrb[0].mxu0
        %v1083 = vpop.f32.mrb[0].mxu0
        %v1084 = vadd.f32 %v988, %v1083
        %v1085 = vpop.f32.mrb[0].mxu0
        %1086 = vmatprep.mubr.bf16.mxu0 0
        %1087 = vmatmul.mubr.bf16.gmra.mrb[0].mxu0 %v978
        %v1088 = vpop.f32.mrb[0].mxu0
        %v1089 = vadd.f32 %v988, %v1088
        %v1090 = vpop.f32.mrb[0].mxu0
        %v1091 = vpop.f32.mrb[0].mxu0
        %v1092 = vadd.f32 %v988, %v1091
        %v1093 = vpop.f32.mrb[0].mxu0
        %1094 = vmatprep.mubr.bf16.mxu0 0
        %1095 = vmatmul.mubr.bf16.gmra.mrb[0].mxu0 %v979
        %v1096 = vpop.f32.mrb[0].mxu0
        %v1097 = vadd.f32 %v988, %v1096
        %v1098 = vpop.f32.mrb[0].mxu0
        %v1099 = vpop.f32.mrb[0].mxu0
        %v1100 = vadd.f32 %v988, %v1099
        %v1101 = vpop.f32.mrb[0].mxu0
        %1102 = vmatprep.mubr.bf16.mxu0 0
        %1103 = vmatmul.mubr.bf16.gmra.mrb[0].mxu0 %v980
        %v1104 = vpop.f32.mrb[0].mxu0
        %v1105 = vadd.f32 %v988, %v1104
        %v1106 = vpop.f32.mrb[0].mxu0
        %v1107 = vpop.f32.mrb[0].mxu0
        %v1108 = vadd.f32 %v988, %v1107
        %v1109 = vpop.f32.mrb[0].mxu0
        %1110 = vmatprep.mubr.bf16.mxu0 0
        %1111 = vmatmul.mubr.bf16.gmra.mrb[0].mxu0 %v981
        %v1112 = vpop.f32.mrb[0].mxu0
        %v1113 = vadd.f32 %v988, %v1112
        %v1114 = vpop.f32.mrb[0].mxu0
        %v1115 = vpop.f32.mrb[0].mxu0
        %v1116 = vadd.f32 %v988, %v1115
        %v1117 = vpop.f32.mrb[0].mxu0
        %1118 = vmatprep.mubr.bf16.mxu0 0
        %1119 = vmatmul.mubr.bf16.gmra.mrb[0].mxu0 %v982
        %v1120 = vpop.f32.mrb[0].mxu0
        %v1121 = vadd.f32 %v988, %v1120
        %v1122 = vpop.f32.mrb[0].mxu0
        %v1123 = vpop.f32.mrb[0].mxu0
        %v1124 = vadd.f32 %v988, %v1123
        %v1125 = vpop.f32.mrb[0].mxu0
        %1126 = vmatprep.mubr.bf16.mxu0 0
        %1127 = vmatmul.mubr.bf16.gmra.mrb[0].mxu0 %v983
        %v1128 = vpop.f32.mrb[0].mxu0
        %v1129 = vadd.f32 %v988, %v1128
        %v1130 = vpop.f32.mrb[0].mxu0
        %v1131 = vpop.f32.mrb[0].mxu0
        %v1132 = vadd.f32 %v988, %v1131
        %v1133 = vpop.f32.mrb[0].mxu0
        %1134 = vdwg.mxu0
        %v1135 = vpack.c.bf16 %v1076, %v1073
        %v1136 = vpack.c.bf16 %v1084, %v1081
        %v1137 = vpack.c.bf16 %v1092, %v1089
        %v1138 = vpack.c.bf16 %v1100, %v1097
        %v1139 = vpack.c.bf16 %v1108, %v1105
        %v1140 = vpack.c.bf16 %v1116, %v1113
        %v1141 = vpack.c.bf16 %v1124, %v1121
        %v1142 = vpack.c.bf16 %v1132, %v1129
        %v1151 = vunpack.c.l.b16 %v1135
        %v1152 = vunpack.c.h.b16 %v1135
        %v1153 = vunpack.c.l.b16 %v1136
        %v1154 = vunpack.c.h.b16 %v1136
        %v1155 = vunpack.c.l.b16 %v1137
        %v1156 = vunpack.c.h.b16 %v1137
        %v1157 = vunpack.c.l.b16 %v1138
        %v1158 = vunpack.c.h.b16 %v1138
        %v1159 = vunpack.c.l.b16 %v1139
        %v1160 = vunpack.c.h.b16 %v1139
        %v1161 = vunpack.c.l.b16 %v1140
        %v1162 = vunpack.c.h.b16 %v1140
        %v1163 = vunpack.c.l.b16 %v1141
        %v1164 = vunpack.c.h.b16 %v1141
        %v1165 = vunpack.c.l.b16 %v1142
        %v1166 = vunpack.c.h.b16 %v1142
        %v1167 = vpack.c.b16 %v1151, %v1151
        %v1168 = vpack.c.b16 %v1152, %v1152
        %v1169 = vpack.c.b16 %v1153, %v1153
        %v1170 = vpack.c.b16 %v1154, %v1154
        %v1171 = vpack.c.b16 %v1155, %v1155
        %v1172 = vpack.c.b16 %v1156, %v1156
        %v1173 = vpack.c.b16 %v1157, %v1157
        %v1174 = vpack.c.b16 %v1158, %v1158
        %v1175 = vpack.c.b16 %v1159, %v1159
        %v1176 = vpack.c.b16 %v1160, %v1160
        %v1177 = vpack.c.b16 %v1161, %v1161
        %v1178 = vpack.c.b16 %v1162, %v1162
        %v1179 = vpack.c.b16 %v1163, %v1163
        %v1180 = vpack.c.b16 %v1164, %v1164
        %v1181 = vpack.c.b16 %v1165, %v1165
        %v1182 = vpack.c.b16 %v1166, %v1166
        %1199 = vst [vmem:[%s342] sm:$0xf] %v1167
        %1200 = vst [vmem:[%s342 + $0x4] sm:$0xf] %v1168
        %1201 = vst [vmem:[%s342 + $0x8] sm:$0xf] %v1169
        %1202 = vst [vmem:[%s342 + $0xc] sm:$0xf] %v1170
        %1203 = vst [vmem:[%s342 + $0x10] sm:$0xf] %v1171
        %1204 = vst [vmem:[%s342 + $0x14] sm:$0xf] %v1172
        %1205 = vst [vmem:[%s342 + $0x18] sm:$0xf] %v1173
        %1206 = vst [vmem:[%s342 + $0x1c] sm:$0xf] %v1174
        %1207 = vst [vmem:[%s342 + $0x20] sm:$0xf] %v1175
        %1208 = vst [vmem:[%s342 + $0x24] sm:$0xf] %v1176
        %1209 = vst [vmem:[%s342 + $0x28] sm:$0xf] %v1177
        %1210 = vst [vmem:[%s342 + $0x2c] sm:$0xf] %v1178
        %1211 = vst [vmem:[%s342 + $0x30] sm:$0xf] %v1179
        %1212 = vst [vmem:[%s342 + $0x34] sm:$0xf] %v1180
        %1213 = vst [vmem:[%s342 + $0x38] sm:$0xf] %v1181
        %1214 = vst [vmem:[%s342 + $0x3c] sm:$0xf] %v1182
        %s1215 = sand.u32 %s230, 1
        %s1216 = scalar_lea.sflag [#allocation3], %s1215
        %s1217 = sand.u32 %s230, 1
        %s1218 = smul.addr %s1217, 64
        %s1219 = scalar_lea.vmem [#allocation2], %s1218
        // Predicated region
        $region57: #{tpu_custom_call.1} parent=55 // pred_check
          %p1220 = pneg %p240
        $region58: #{tpu_custom_call.1} parent=55 // pred_check_branch
          %1222 = sbr.rel (%p1220) target = $region60
        $region59: #{tpu_custom_call.1} parent=55 // pred_region
          %s1223 = smul.u32 16, %s23
          %s1225 = ssub.s32 1024, 1024
          %1226 = vsyncadd %s1216, %s1225
          %s1227 = smul.addr %s1223, 64
          %s1228 = scalar_lea.hbm %s9, %s1227
          %s1229 = sshll.u32 %s1219, 4
          %s1230 = int_to_ptr.vmem [resolvable:$true] %s1229
          %1235 = dma.vmem_to_hbm [thread:$0]  %s1230, 1024, %s1228, %s1216, 64, 64, 4
        $region60: #{tpu_custom_call.1} parent=55 // pred_fallthru
          _
      $region56: #{tpu_custom_call.1} parent=5 // pred_fallthru
        _
      %p1236 = scmp.le.s32.totalorder 2, %s18
      // Predicated region
      $region61: #{tpu_custom_call.1} parent=5 // pred_check
        %p1237 = pneg %p1236
      $region62: #{tpu_custom_call.1} parent=5 // pred_check_branch
        %1239 = sbr.rel (%p1237) target = $region64
      $region63: #{tpu_custom_call.1} parent=5 // pred_region
        %s1240 = ssub.s32 %s18, 2
        // Predicated region
        $region65: #{tpu_custom_call.1} parent=63 // pred_check
          %p1241 = pneg %p246
        $region66: #{tpu_custom_call.1} parent=63 // pred_check_branch
          %1243 = sbr.rel (%p1241) target = $region68
        $region67: #{tpu_custom_call.1} parent=63 // pred_region
          %s1244 = sand.u32 %s231, 1
          %s1245 = scalar_lea.sflag [#allocation3], %s1244
          %s1246 = sand.u32 %s231, 1
          %s1247 = smul.addr %s1246, 64
          %s1248 = scalar_lea.vmem [#allocation2], %s1247
          %1249 = dma.done %s1245, 1024
        $region68: #{tpu_custom_call.1} parent=63 // pred_fallthru
          _
      $region64: #{tpu_custom_call.1} parent=5 // pred_fallthru
        _
    $region6: #{tpu_custom_call.1} parent=1 // loop_footer
      %s22 = sadd.s32 1, %s18
    $region7: #{tpu_custom_call.1} parent=1 // loop_footer_branch
      %17 = sbr.rel target = $region3
    $region8: #{tpu_custom_call.1} parent=1 // loop_exit
      _
    %1250 = vsyncpa [#allocation3], 1
    %s1251 = scalar_lea.sflag [#allocation3], 1
    %1252 = vsyncpa %s1251, 1

// kernel: tpu_custom_call.1
$region0: #{tpu_custom_call.1}
  #allocation0 [shape = 'u32[]', space=smem, size = 0x4, offset = 0x4, fixed_abs, tag = 'smem constant byte address 0x4 - core index']
  #allocation1 [shape = 'u32[144,128]{1,0:T(1,128)}', space=vmem, size = 0x12000, scoped, tag = 'internal scratch']
  %s0 = inlined_call_operand.vmem [shape: bf16[256,16], index: 0, kind: input, shape index: {}]
  %s1 = inlined_call_operand.vmem [shape: bf16[256,16], index: 1, kind: input, shape index: {}]
  %s2 = inlined_call_operand.vmem [shape: bf16[16,128], index: 2, kind: input, shape index: {}]
  %s3 = inlined_call_operand.vmem [shape: bf16[16,128], index: 3, kind: input, shape index: {}]
  %s4 = inlined_call_operand.vmem [shape: f32[1,128], index: 4, kind: input, shape index: {}]
  %s5 = inlined_call_operand.vmem [shape: bf16[128,128], index: 5, kind: input, shape index: {}]
  %s6 = inlined_call_operand.vmem [shape: f32[1,128], index: 6, kind: input, shape index: {}]
  %s7 = inlined_call_operand.vmem [shape: bf16[128,128], index: 7, kind: input, shape index: {}]
  %s8 = inlined_call_operand.vmem [shape: f32[1,128], index: 8, kind: input, shape index: {}]
  %s9 = inlined_call_operand.hbm [shape: bf16[256,128], index: 9, kind: output, shape index: {}]
  %s10 = sld [smem:[#allocation0]]
  $region69: #{tpu_custom_call.1} parent=0
    _
  %s12 = ssub.s32 1, %s10
  %s13 = scalar_select 0, %s12, %s10
  $region1: #{tpu_custom_call.1} parent=0
    #allocation2 [shape = 'u8[65536]{0}', space=vmem, size = 0x10000, scoped, tag = 'output window, operand 0']
    #allocation3 [shape = 's32[2]{0}', space=sflag, size = 0x8, scoped, tag = 'scoped memory for tpu_custom_call.1']
    %14 = vsyncpa [#allocation3], 0
    %s15 = scalar_lea.sflag [#allocation3], 1
    %16 = vsyncpa %s15, 0
    loop: start=0, step=1, limit=4
    $region2: #{tpu_custom_call.1} parent=1 // loop_pre_header
      _
    $region3: #{tpu_custom_call.1} parent=1 // loop_header
      %s18 = sphi 0, %s22
      %p19 = scmp.ge.s32.totalorder %s18, 4
      %s28 = sphi 0, %s30
      %s31 = sphi 0, %s28
      %s32 = sphi 0, %s31
      %s48 = sphi 0, %s32
      %s54 = sphi 0, %s56
      %s57 = sphi 0, %s54
      %s58 = sphi 0, %s57
      %s74 = sphi 0, %s58
      %s78 = sphi 0, %s78
      %s80 = sphi 0, %s78
      %s81 = sphi 0, %s80
      %s95 = sphi 0, %s81
      %s99 = sphi 0, %s99
      %s101 = sphi 0, %s99
      %s102 = sphi 0, %s101
      %s116 = sphi 0, %s102
      %s120 = sphi 0, %s120
      %s122 = sphi 0, %s120
      %s123 = sphi 0, %s122
      %s137 = sphi 0, %s123
      %s141 = sphi 0, %s141
      %s143 = sphi 0, %s141
      %s144 = sphi 0, %s143
      %s158 = sphi 0, %s144
      %s162 = sphi 0, %s162
      %s164 = sphi 0, %s162
      %s165 = sphi 0, %s164
      %s179 = sphi 0, %s165
      %s183 = sphi 0, %s183
      %s185 = sphi 0, %s183
      %s186 = sphi 0, %s185
      %s200 = sphi 0, %s186
      %s204 = sphi 0, %s204
      %s206 = sphi 0, %s204
      %s207 = sphi 0, %s206
      %s221 = sphi 0, %s207
      %s227 = sphi 0, %s229
      %s230 = sphi 0, %s227
      %s231 = sphi 0, %s230
      %s247 = sphi 0, %s231
    $region4: #{tpu_custom_call.1} parent=1 // loop_header_branch
      %21 = sbr.rel (%p19) target = $region8
    $region5: #{tpu_custom_call.1} parent=1 // loop_body
      %s23 = ssub.s32 %s18, 1
      %s24 = ssub.s32 %s18, 2
      %s25 = sadd.s32 %s18, 1
      %s26 = ssub.s32 %s18, %s25
      %p27 = scmp.eq.s32.totalorder %s26, 0
      %s29 = sadd.s32 %s28, 1
      %s30 = scalar_select %p27, %s28, %s29
      %p33 = pneg %p27
      %p34 = scmp.eq.s32.totalorder %s18, 1
      %p35 = por %p33, %p34
      %p36 = scmp.ne.s32.totalorder %s28, %s31
      %p37 = scmp.eq.s32.totalorder %s18, 0
      %p38 = por %p36, %p37
      %p39 = scmp.ne.s32.totalorder %s28, %s31
      %p40 = scmp.eq.s32.totalorder %s23, 1
      %p41 = por %p39, %p40
      %p42 = scmp.ne.s32.totalorder %s31, %s32
      %p43 = scmp.eq.s32.totalorder %s23, 0
      %p44 = por %p42, %p43
      %p45 = scmp.ne.s32.totalorder %s31, %s32
      %p46 = scmp.eq.s32.totalorder %s24, 1
      %p47 = por %p45, %p46
      %p49 = scmp.ne.s32.totalorder %s32, %s48
      %p50 = scmp.eq.s32.totalorder %s24, 0
      %p51 = por %p49, %p50
      %s52 = ssub.s32 %s18, %s25
      %p53 = scmp.eq.s32.totalorder %s52, 0
      %s55 = sadd.s32 %s54, 1
      %s56 = scalar_select %p53, %s54, %s55
      %p59 = pneg %p53
      %p60 = scmp.eq.s32.totalorder %s18, 1
      %p61 = por %p59, %p60
      %p62 = scmp.ne.s32.totalorder %s54, %s57
      %p63 = scmp.eq.s32.totalorder %s18, 0
      %p64 = por %p62, %p63
      %p65 = scmp.ne.s32.totalorder %s54, %s57
      %p66 = scmp.eq.s32.totalorder %s23, 1
      %p67 = por %p65, %p66
      %p68 = scmp.ne.s32.totalorder %s57, %s58
      %p69 = scmp.eq.s32.totalorder %s23, 0
      %p70 = por %p68, %p69
      %p71 = scmp.ne.s32.totalorder %s57, %s58
      %p72 = scmp.eq.s32.totalorder %s24, 1
      %p73 = por %p71, %p72
      %p75 = scmp.ne.s32.totalorder %s58, %s74
      %p76 = scmp.eq.s32.totalorder %s24, 0
      %p77 = por %p75, %p76
      %s79 = sadd.s32 %s78, 1
      %p82 = scmp.eq.s32.totalorder %s18, 1
      %p83 = scmp.ne.s32.totalorder %s78, %s80
      %p84 = scmp.eq.s32.totalorder %s18, 0
      %p85 = por %p83, %p84
      %p86 = scmp.ne.s32.totalorder %s78, %s80
      %p87 = scmp.eq.s32.totalorder %s23, 1
      %p88 = por %p86, %p87
      %p89 = scmp.ne.s32.totalorder %s80, %s81
      %p90 = scmp.eq.s32.totalorder %s23, 0
      %p91 = por %p89, %p90
      %p92 = scmp.ne.s32.totalorder %s80, %s81
      %p93 = scmp.eq.s32.totalorder %s24, 1
      %p94 = por %p92, %p93
      %p96 = scmp.ne.s32.totalorder %s81, %s95
      %p97 = scmp.eq.s32.totalorder %s24, 0
      %p98 = por %p96, %p97
      %s100 = sadd.s32 %s99, 1
      %p103 = scmp.eq.s32.totalorder %s18, 1
      %p104 = scmp.ne.s32.totalorder %s99, %s101
      %p105 = scmp.eq.s32.totalorder %s18, 0
      %p106 = por %p104, %p105
      %p107 = scmp.ne.s32.totalorder %s99, %s101
      %p108 = scmp.eq.s32.totalorder %s23, 1
      %p109 = por %p107, %p108
      %p110 = scmp.ne.s32.totalorder %s101, %s102
      %p111 = scmp.eq.s32.totalorder %s23, 0
      %p112 = por %p110, %p111
      %p113 = scmp.ne.s32.totalorder %s101, %s102
      %p114 = scmp.eq.s32.totalorder %s24, 1
      %p115 = por %p113, %p114
      %p117 = scmp.ne.s32.totalorder %s102, %s116
      %p118 = scmp.eq.s32.totalorder %s24, 0
      %p119 = por %p117, %p118
      %s121 = sadd.s32 %s120, 1
      %p124 = scmp.eq.s32.totalorder %s18, 1
      %p125 = scmp.ne.s32.totalorder %s120, %s122
      %p126 = scmp.eq.s32.totalorder %s18, 0
      %p127 = por %p125, %p126
      %p128 = scmp.ne.s32.totalorder %s120, %s122
      %p129 = scmp.eq.s32.totalorder %s23, 1
      %p130 = por %p128, %p129
      %p131 = scmp.ne.s32.totalorder %s122, %s123
      %p132 = scmp.eq.s32.totalorder %s23, 0
      %p133 = por %p131, %p132
      %p134 = scmp.ne.s32.totalorder %s122, %s123
      %p135 = scmp.eq.s32.totalorder %s24, 1
      %p136 = por %p134, %p135
      %p138 = scmp.ne.s32.totalorder %s123, %s137
      %p139 = scmp.eq.s32.totalorder %s24, 0
      %p140 = por %p138, %p139
      %s142 = sadd.s32 %s141, 1
      %p145 = scmp.eq.s32.totalorder %s18, 1
      %p146 = scmp.ne.s32.totalorder %s141, %s143
      %p147 = scmp.eq.s32.totalorder %s18, 0
      %p148 = por %p146, %p147
      %p149 = scmp.ne.s32.totalorder %s141, %s143
      %p150 = scmp.eq.s32.totalorder %s23, 1
      %p151 = por %p149, %p150
      %p152 = scmp.ne.s32.totalorder %s143, %s144
      %p153 = scmp.eq.s32.totalorder %s23, 0
      %p154 = por %p152, %p153
      %p155 = scmp.ne.s32.totalorder %s143, %s144
      %p156 = scmp.eq.s32.totalorder %s24, 1
      %p157 = por %p155, %p156
      %p159 = scmp.ne.s32.totalorder %s144, %s158
      %p160 = scmp.eq.s32.totalorder %s24, 0
      %p161 = por %p159, %p160
      %s163 = sadd.s32 %s162, 1
      %p166 = scmp.eq.s32.totalorder %s18, 1
      %p167 = scmp.ne.s32.totalorder %s162, %s164
      %p168 = scmp.eq.s32.totalorder %s18, 0
      %p169 = por %p167, %p168
      %p170 = scmp.ne.s32.totalorder %s162, %s164
      %p171 = scmp.eq.s32.totalorder %s23, 1
      %p172 = por %p170, %p171
      %p173 = scmp.ne.s32.totalorder %s164, %s165
      %p174 = scmp.eq.s32.totalorder %s23, 0
      %p175 = por %p173, %p174
      %p176 = scmp.ne.s32.totalorder %s164, %s165
      %p177 = scmp.eq.s32.totalorder %s24, 1
      %p178 = por %p176, %p177
      %p180 = scmp.ne.s32.totalorder %s165, %s179
      %p181 = scmp.eq.s32.totalorder %s24, 0
      %p182 = por %p180, %p181
      %s184 = sadd.s32 %s183, 1
      %p187 = scmp.eq.s32.totalorder %s18, 1
      %p188 = scmp.ne.s32.totalorder %s183, %s185
      %p189 = scmp.eq.s32.totalorder %s18, 0
      %p190 = por %p188, %p189
      %p191 = scmp.ne.s32.totalorder %s183, %s185
      %p192 = scmp.eq.s32.totalorder %s23, 1
      %p193 = por %p191, %p192
      %p194 = scmp.ne.s32.totalorder %s185, %s186
      %p195 = scmp.eq.s32.totalorder %s23, 0
      %p196 = por %p194, %p195
      %p197 = scmp.ne.s32.totalorder %s185, %s186
      %p198 = scmp.eq.s32.totalorder %s24, 1
      %p199 = por %p197, %p198
      %p201 = scmp.ne.s32.totalorder %s186, %s200
      %p202 = scmp.eq.s32.totalorder %s24, 0
      %p203 = por %p201, %p202
      %s205 = sadd.s32 %s204, 1
      %p208 = scmp.eq.s32.totalorder %s18, 1
      %p209 = scmp.ne.s32.totalorder %s204, %s206
      %p210 = scmp.eq.s32.totalorder %s18, 0
      %p211 = por %p209, %p210
      %p212 = scmp.ne.s32.totalorder %s204, %s206
      %p213 = scmp.eq.s32.totalorder %s23, 1
      %p214 = por %p212, %p213
      %p215 = scmp.ne.s32.totalorder %s206, %s207
      %p216 = scmp.eq.s32.totalorder %s23, 0
      %p217 = por %p215, %p216
      %p218 = scmp.ne.s32.totalorder %s206, %s207
      %p219 = scmp.eq.s32.totalorder %s24, 1
      %p220 = por %p218, %p219
      %p222 = scmp.ne.s32.totalorder %s207, %s221
      %p223 = scmp.eq.s32.totalorder %s24, 0
      %p224 = por %p222, %p223
      %s225 = ssub.s32 %s18, %s25
      %p226 = scmp.eq.s32.totalorder %s225, 0
      %s228 = sadd.s32 %s227, 1
      %s229 = scalar_select %p226, %s227, %s228
      %p232 = pneg %p226
      %p233 = scmp.eq.s32.totalorder %s18, 1
      %p234 = por %p232, %p233
      %p235 = scmp.ne.s32.totalorder %s227, %s230
      %p236 = scmp.eq.s32.totalorder %s18, 0
      %p237 = por %p235, %p236
      %p238 = scmp.ne.s32.totalorder %s227, %s230
      %p239 = scmp.eq.s32.totalorder %s23, 1
      %p240 = por %p238, %p239
      %p241 = scmp.ne.s32.totalorder %s230, %s231
      %p242 = scmp.eq.s32.totalorder %s23, 0
      %p243 = por %p241, %p242
      %p244 = scmp.ne.s32.totalorder %s230, %s231
      %p245 = scmp.eq.s32.totalorder %s24, 1
      %p246 = por %p244, %p245
      %p248 = scmp.ne.s32.totalorder %s231, %s247
      %p249 = scmp.eq.s32.totalorder %s24, 0
      %p250 = por %p248, %p249
      %p251 = scmp.le.s32.totalorder 1, %s18
      %p252 = scmp.lt.s32.totalorder %s18, 3
      %p253 = pnand %p251, %p252
      %p254 = pneg %p253
      // Predicated region
      $region9: #{tpu_custom_call.1} parent=5 // pred_check
        _
      $region10: #{tpu_custom_call.1} parent=5 // pred_check_branch
        %256 = sbr.rel (%p253) target = $region12
      $region11: #{tpu_custom_call.1} parent=5 // pred_region
        %s257 = ssub.s32 %s18, 1
        // Predicated region
        $region13: #{tpu_custom_call.1} parent=11 // pred_check
          %p258 = pneg %p91
        $region14: #{tpu_custom_call.1} parent=11 // pred_check_branch
          %260 = sbr.rel (%p258) target = $region16
        $region15: #{tpu_custom_call.1} parent=11 // pred_region
          _
        $region16: #{tpu_custom_call.1} parent=11 // pred_fallthru
          _
        // Predicated region
        $region17: #{tpu_custom_call.1} parent=11 // pred_check
          %p261 = pneg %p112
        $region18: #{tpu_custom_call.1} parent=11 // pred_check_branch
          %263 = sbr.rel (%p261) target = $region20
        $region19: #{tpu_custom_call.1} parent=11 // pred_region
          _
        $region20: #{tpu_custom_call.1} parent=11 // pred_fallthru
          _
        // Predicated region
        $region21: #{tpu_custom_call.1} parent=11 // pred_check
          %p264 = pneg %p133
        $region22: #{tpu_custom_call.1} parent=11 // pred_check_branch
          %266 = sbr.rel (%p264) target = $region24
        $region23: #{tpu_custom_call.1} parent=11 // pred_region
          _
        $region24: #{tpu_custom_call.1} parent=11 // pred_fallthru
          _
        // Predicated region
        $region25: #{tpu_custom_call.1} parent=11 // pred_check
          %p267 = pneg %p154
        $region26: #{tpu_custom_call.1} parent=11 // pred_check_branch
          %269 = sbr.rel (%p267) target = $region28
        $region27: #{tpu_custom_call.1} parent=11 // pred_region
          _
        $region28: #{tpu_custom_call.1} parent=11 // pred_fallthru
          _
        // Predicated region
        $region29: #{tpu_custom_call.1} parent=11 // pred_check
          %p270 = pneg %p175
        $region30: #{tpu_custom_call.1} parent=11 // pred_check_branch
          %272 = sbr.rel (%p270) target = $region32
        $region31: #{tpu_custom_call.1} parent=11 // pred_region
          _
        $region32: #{tpu_custom_call.1} parent=11 // pred_fallthru
          _
        // Predicated region
        $region33: #{tpu_custom_call.1} parent=11 // pred_check
          %p273 = pneg %p196
        $region34: #{tpu_custom_call.1} parent=11 // pred_check_branch
          %275 = sbr.rel (%p273) target = $region36
        $region35: #{tpu_custom_call.1} parent=11 // pred_region
          _
        $region36: #{tpu_custom_call.1} parent=11 // pred_fallthru
          _
        // Predicated region
        $region37: #{tpu_custom_call.1} parent=11 // pred_check
          %p276 = pneg %p217
        $region38: #{tpu_custom_call.1} parent=11 // pred_check_branch
          %278 = sbr.rel (%p276) target = $region40
        $region39: #{tpu_custom_call.1} parent=11 // pred_region
          _
        $region40: #{tpu_custom_call.1} parent=11 // pred_fallthru
          _
      $region12: #{tpu_custom_call.1} parent=5 // pred_fallthru
        _
      %p279 = scmp.lt.s32.totalorder %s18, 2
      // Predicated region
      $region41: #{tpu_custom_call.1} parent=5 // pred_check
        %p280 = pneg %p279
      $region42: #{tpu_custom_call.1} parent=5 // pred_check_branch
        %282 = sbr.rel (%p280) target = $region44
      $region43: #{tpu_custom_call.1} parent=5 // pred_region
        // Predicated region
        $region45: #{tpu_custom_call.1} parent=43 // pred_check
          %p283 = pneg %p38
        $region46: #{tpu_custom_call.1} parent=43 // pred_check_branch
          %285 = sbr.rel (%p283) target = $region48
        $region47: #{tpu_custom_call.1} parent=43 // pred_region
          %s286 = smul.u32 16, %s18
          %p287 = scmp.lt.s32.totalorder %s286, 31
          %s288 = scalar_select %p287, %s286, 31
          %s289 = smul.addr %s288, 4
          %s290 = scalar_lea.vmem %s0, %s289
          %s291 = smul.u32 16, %s18
        $region48: #{tpu_custom_call.1} parent=43 // pred_fallthru
          _
        // Predicated region
        $region49: #{tpu_custom_call.1} parent=43 // pred_check
          %p292 = pneg %p64
        $region50: #{tpu_custom_call.1} parent=43 // pred_check_branch
          %294 = sbr.rel (%p292) target = $region52
        $region51: #{tpu_custom_call.1} parent=43 // pred_region
          %s295 = smul.u32 16, %s18
          %p296 = scmp.lt.s32.totalorder %s295, 31
          %s297 = scalar_select %p296, %s295, 31
          %s298 = smul.addr %s297, 4
          %s299 = scalar_lea.vmem %s1, %s298
          %s300 = smul.u32 16, %s18
        $region52: #{tpu_custom_call.1} parent=43 // pred_fallthru
          _
      $region44: #{tpu_custom_call.1} parent=5 // pred_fallthru
        _
      %p301 = scmp.le.s32.totalorder 1, %s18
      %p302 = scmp.lt.s32.totalorder %s18, 3
      %p303 = pnand %p301, %p302
      %p304 = pneg %p303
      // Predicated region
      $region53: #{tpu_custom_call.1} parent=5 // pred_check
        _
      $region54: #{tpu_custom_call.1} parent=5 // pred_check_branch
        %306 = sbr.rel (%p303) target = $region56
      $region55: #{tpu_custom_call.1} parent=5 // pred_region
        %s307 = ssub.s32 %s18, 1
        %s308 = smul.u32 16, %s23
        %p309 = scmp.lt.s32.totalorder %s308, 31
        %s310 = scalar_select %p309, %s308, 31
        %s311 = smul.addr %s310, 4
        %s312 = scalar_lea.vmem %s0, %s311
        %p313 = pneg %p44
        %p314 = pneg %p41
        %s315 = smul.u32 16, %s23
        %p316 = scmp.lt.s32.totalorder %s315, 31
        %s317 = scalar_select %p316, %s315, 31
        %s318 = smul.addr %s317, 4
        %s319 = scalar_lea.vmem %s1, %s318
        %p320 = pneg %p70
        %p321 = pneg %p67
        %p322 = pneg %p91
        %p323 = pneg %p88
        %p324 = pneg %p112
        %p325 = pneg %p109
        %p326 = pneg %p133
        %p327 = pneg %p130
        %p328 = pneg %p154
        %p329 = pneg %p151
        %p330 = pneg %p175
        %p331 = pneg %p172
        %p332 = pneg %p196
        %p333 = pneg %p193
        %p334 = pneg %p217
        %p335 = pneg %p214
        %p336 = pneg %p243
        %p337 = pneg %p240
        %s338 = sand.u32 %s230, 1
        %s339 = scalar_lea.sflag [#allocation3], %s338
        %s340 = sand.u32 %s230, 1
        %s341 = smul.addr %s340, 64
        %s342 = scalar_lea.vmem [#allocation2], %s341
        %s343 = smul.u32 16, %s23
        %p344 = scmp.lt.s32.totalorder %s343, 31
        %s345 = scalar_select %p344, %s343, 31
        %s346 = smul.addr %s345, 4
        %s347 = scalar_lea.vmem %s0, %s346
        %s348 = smul.u32 16, %s23
        %s349 = smul.u32 16, %s23
        %p350 = scmp.lt.s32.totalorder %s349, 31
        %s351 = scalar_select %p350, %s349, 31
        %s352 = smul.addr %s351, 4
        %s353 = scalar_lea.vmem %s1, %s352
        %s354 = smul.u32 16, %s23
        %s355 = smul.u32 16, %s23
        %v357 = vld [vmem:[%s347] sm:$0xf]
        %v358 = vld [vmem:[%s347 + $0x4] sm:$0xf]
        %v359 = vld [vmem:[%s347 + $0x8] sm:$0xf]
        %v360 = vld [vmem:[%s347 + $0xc] sm:$0xf]
        %v361 = vld [vmem:[%s347 + $0x10] sm:$0xf]
        %v362 = vld [vmem:[%s347 + $0x14] sm:$0xf]
        %v363 = vld [vmem:[%s347 + $0x18] sm:$0xf]
        %v364 = vld [vmem:[%s347 + $0x1c] sm:$0xf]
        %v365 = vld [vmem:[%s347 + $0x20] sm:$0xf]
        %v366 = vld [vmem:[%s347 + $0x24] sm:$0xf]
        %v367 = vld [vmem:[%s347 + $0x28] sm:$0xf]
        %v368 = vld [vmem:[%s347 + $0x2c] sm:$0xf]
        %v369 = vld [vmem:[%s347 + $0x30] sm:$0xf]
        %v370 = vld [vmem:[%s347 + $0x34] sm:$0xf]
        %v371 = vld [vmem:[%s347 + $0x38] sm:$0xf]
        %v372 = vld [vmem:[%s347 + $0x3c] sm:$0xf]
        %v373 = vld [vmem:[%s2] sm:$0xf]
        %v374 = vld [vmem:[%s2 + $0x4] sm:$0xf]
        %v375 = vld [vmem:[%s353] sm:$0xf]
        %v376 = vld [vmem:[%s353 + $0x4] sm:$0xf]
        %v377 = vld [vmem:[%s353 + $0x8] sm:$0xf]
        %v378 = vld [vmem:[%s353 + $0xc] sm:$0xf]
        %v379 = vld [vmem:[%s353 + $0x10] sm:$0xf]
        %v380 = vld [vmem:[%s353 + $0x14] sm:$0xf]
        %v381 = vld [vmem:[%s353 + $0x18] sm:$0xf]
        %v382 = vld [vmem:[%s353 + $0x1c] sm:$0xf]
        %v383 = vld [vmem:[%s353 + $0x20] sm:$0xf]
        %v384 = vld [vmem:[%s353 + $0x24] sm:$0xf]
        %v385 = vld [vmem:[%s353 + $0x28] sm:$0xf]
        %v386 = vld [vmem:[%s353 + $0x2c] sm:$0xf]
        %v387 = vld [vmem:[%s353 + $0x30] sm:$0xf]
        %v388 = vld [vmem:[%s353 + $0x34] sm:$0xf]
        %v389 = vld [vmem:[%s353 + $0x38] sm:$0xf]
        %v390 = vld [vmem:[%s353 + $0x3c] sm:$0xf]
        %v391 = vld [vmem:[%s3] sm:$0xf]
        %v392 = vld [vmem:[%s3 + $0x4] sm:$0xf]
        %v409 = vunpack.c.l.b16 %v375
        %v410 = vunpack.c.l.b16 %v376
        %v411 = vunpack.c.l.b16 %v377
        %v412 = vunpack.c.l.b16 %v378
        %v413 = vunpack.c.l.b16 %v379
        %v414 = vunpack.c.l.b16 %v380
        %v415 = vunpack.c.l.b16 %v381
        %v416 = vunpack.c.l.b16 %v382
        %v417 = vunpack.c.l.b16 %v383
        %v418 = vunpack.c.l.b16 %v384
        %v419 = vunpack.c.l.b16 %v385
        %v420 = vunpack.c.l.b16 %v386
        %v421 = vunpack.c.l.b16 %v387
        %v422 = vunpack.c.l.b16 %v388
        %v423 = vunpack.c.l.b16 %v389
        %v424 = vunpack.c.l.b16 %v390
        %v425 = vpack.c.b16 %v410, %v409
        %v426 = vpack.c.b16 %v412, %v411
        %v427 = vpack.c.b16 %v414, %v413
        %v428 = vpack.c.b16 %v416, %v415
        %v429 = vpack.c.b16 %v418, %v417
        %v430 = vpack.c.b16 %v420, %v419
        %v431 = vpack.c.b16 %v422, %v421
        %v432 = vpack.c.b16 %v424, %v423
        %v435 = vunpack.c.l.b16 %v391
        %v436 = vunpack.c.l.b16 %v392
        %v437 = vpack.c.b16 %v436, %v435
        %vm439 = vcmask 130048
        %v441 = vsel %vm439, %v425, 0
        %v444 = vsel %vm439, %v426, 0
        %v447 = vsel %vm439, %v427, 0
        %v450 = vsel %vm439, %v428, 0
        %v453 = vsel %vm439, %v429, 0
        %v456 = vsel %vm439, %v430, 0
        %v459 = vsel %vm439, %v431, 0
        %v462 = vsel %vm439, %v432, 0
        %464 = vmatprep.subr.bf16.mxu0 0
        %465 = vmatpush1.bf16.msra.mxu0 %v437
        %466 = vmatprep.subr.bf16.mxu0 0
        %467 = vmatpush1.bf16.msra.mxu0 0
        %468 = vmatprep.subr.bf16.mxu0 0
        %469 = vmatpush1.bf16.msra.mxu0 0
        %470 = vmatprep.subr.bf16.mxu0 0
        %471 = vmatpush1.bf16.msra.mxu0 0
        %472 = vmatprep.subr.bf16.mxu0 0
        %473 = vmatpush1.bf16.msra.mxu0 0
        %474 = vmatprep.subr.bf16.mxu0 0
        %475 = vmatpush1.bf16.msra.mxu0 0
        %476 = vmatprep.subr.bf16.mxu0 0
        %477 = vmatpush1.bf16.msra.mxu0 0
        %478 = vmatprep.subr.bf16.mxu0 0
        %479 = vmatpush1.bf16.msra.mxu0 0
        %480 = vmatprep.subr.bf16.mxu0 0
        %481 = vmatpush1.bf16.msra.mxu0 0
        %482 = vmatprep.subr.bf16.mxu0 0
        %483 = vmatpush1.bf16.msra.mxu0 0
        %484 = vmatprep.subr.bf16.mxu0 0
        %485 = vmatpush1.bf16.msra.mxu0 0
        %486 = vmatprep.subr.bf16.mxu0 0
        %487 = vmatpush1.bf16.msra.mxu0 0
        %488 = vmatprep.subr.bf16.mxu0 0
        %489 = vmatpush1.bf16.msra.mxu0 0
        %490 = vmatprep.subr.bf16.mxu0 0
        %491 = vmatpush1.bf16.msra.mxu0 0
        %492 = vmatprep.subr.bf16.mxu0 0
        %493 = vmatpush1.bf16.msra.mxu0 0
        %494 = vmatprep.subr.bf16.mxu0 0
        %495 = vmatpush1.bf16.msra.mxu0 0
        %496 = vmatprep.mubr.bf16.mxu0 0
        %497 = vmatmul.mubr.bf16.gmra.mrb[0].mxu0 %v441
        %v498 = vpop.f32.mrb[0].mxu0
        %v499 = vadd.f32 0.0, %v498
        %v500 = vpop.f32.mrb[0].mxu0
        %v501 = vpop.f32.mrb[0].mxu0
        %v502 = vadd.f32 0.0, %v501
        %v503 = vpop.f32.mrb[0].mxu0
        %504 = vmatprep.mubr.bf16.mxu0 0
        %505 = vmatmul.mubr.bf16.gmra.mrb[0].mxu0 %v444
        %v506 = vpop.f32.mrb[0].mxu0
        %v507 = vadd.f32 0.0, %v506
        %v508 = vpop.f32.mrb[0].mxu0
        %v509 = vpop.f32.mrb[0].mxu0
        %v510 = vadd.f32 0.0, %v509
        %v511 = vpop.f32.mrb[0].mxu0
        %512 = vmatprep.mubr.bf16.mxu0 0
        %513 = vmatmul.mubr.bf16.gmra.mrb[0].mxu0 %v447
        %v514 = vpop.f32.mrb[0].mxu0
        %v515 = vadd.f32 0.0, %v514
        %v516 = vpop.f32.mrb[0].mxu0
        %v517 = vpop.f32.mrb[0].mxu0
        %v518 = vadd.f32 0.0, %v517
        %v519 = vpop.f32.mrb[0].mxu0
        %520 = vmatprep.mubr.bf16.mxu0 0
        %521 = vmatmul.mubr.bf16.gmra.mrb[0].mxu0 %v450
        %v522 = vpop.f32.mrb[0].mxu0
        %v523 = vadd.f32 0.0, %v522
        %v524 = vpop.f32.mrb[0].mxu0
        %v525 = vpop.f32.mrb[0].mxu0
        %v526 = vadd.f32 0.0, %v525
        %v527 = vpop.f32.mrb[0].mxu0
        %528 = vmatprep.mubr.bf16.mxu0 0
        %529 = vmatmul.mubr.bf16.gmra.mrb[0].mxu0 %v453
        %v530 = vpop.f32.mrb[0].mxu0
        %v531 = vadd.f32 0.0, %v530
        %v532 = vpop.f32.mrb[0].mxu0
        %v533 = vpop.f32.mrb[0].mxu0
        %v534 = vadd.f32 0.0, %v533
        %v535 = vpop.f32.mrb[0].mxu0
        %536 = vmatprep.mubr.bf16.mxu0 0
        %537 = vmatmul.mubr.bf16.gmra.mrb[0].mxu0 %v456
        %v538 = vpop.f32.mrb[0].mxu0
        %v539 = vadd.f32 0.0, %v538
        %v540 = vpop.f32.mrb[0].mxu0
        %v541 = vpop.f32.mrb[0].mxu0
        %v542 = vadd.f32 0.0, %v541
        %v543 = vpop.f32.mrb[0].mxu0
        %544 = vmatprep.mubr.bf16.mxu0 0
        %545 = vmatmul.mubr.bf16.gmra.mrb[0].mxu0 %v459
        %v546 = vpop.f32.mrb[0].mxu0
        %v547 = vadd.f32 0.0, %v546
        %v548 = vpop.f32.mrb[0].mxu0
        %v549 = vpop.f32.mrb[0].mxu0
        %v550 = vadd.f32 0.0, %v549
        %v551 = vpop.f32.mrb[0].mxu0
        %552 = vmatprep.mubr.bf16.mxu0 0
        %553 = vmatmul.mubr.bf16.gmra.mrb[0].mxu0 %v462
        %v554 = vpop.f32.mrb[0].mxu0
        %v555 = vadd.f32 0.0, %v554
        %v556 = vpop.f32.mrb[0].mxu0
        %v557 = vpop.f32.mrb[0].mxu0
        %v558 = vadd.f32 0.0, %v557
        %v559 = vpop.f32.mrb[0].mxu0
        %560 = vdwg.mxu0
        %v577 = vunpack.c.l.b16 %v357
        %v578 = vunpack.c.l.b16 %v358
        %v579 = vunpack.c.l.b16 %v359
        %v580 = vunpack.c.l.b16 %v360
        %v581 = vunpack.c.l.b16 %v361
        %v582 = vunpack.c.l.b16 %v362
        %v583 = vunpack.c.l.b16 %v363
        %v584 = vunpack.c.l.b16 %v364
        %v585 = vunpack.c.l.b16 %v365
        %v586 = vunpack.c.l.b16 %v366
        %v587 = vunpack.c.l.b16 %v367
        %v588 = vunpack.c.l.b16 %v368
        %v589 = vunpack.c.l.b16 %v369
        %v590 = vunpack.c.l.b16 %v370
        %v591 = vunpack.c.l.b16 %v371
        %v592 = vunpack.c.l.b16 %v372
        %v593 = vpack.c.b16 %v578, %v577
        %v594 = vpack.c.b16 %v580, %v579
        %v595 = vpack.c.b16 %v582, %v581
        %v596 = vpack.c.b16 %v584, %v583
        %v597 = vpack.c.b16 %v586, %v585
        %v598 = vpack.c.b16 %v588, %v587
        %v599 = vpack.c.b16 %v590, %v589
        %v600 = vpack.c.b16 %v592, %v591
        %v603 = vunpack.c.l.b16 %v373
        %v604 = vunpack.c.l.b16 %v374
        %v605 = vpack.c.b16 %v604, %v603
        %v608 = vsel %vm439, %v593, 0
        %v611 = vsel %vm439, %v594, 0
        %v614 = vsel %vm439, %v595, 0
        %v617 = vsel %vm439, %v596, 0
        %v620 = vsel %vm439, %v597, 0
        %v623 = vsel %vm439, %v598, 0
        %v626 = vsel %vm439, %v599, 0
        %v629 = vsel %vm439, %v600, 0
        %631 = vmatprep.subr.bf16.mxu0 0
        %632 = vmatpush1.bf16.msra.mxu0 %v605
        %633 = vmatprep.subr.bf16.mxu0 0
        %634 = vmatpush1.bf16.msra.mxu0 0
        %635 = vmatprep.subr.bf16.mxu0 0
        %636 = vmatpush1.bf16.msra.mxu0 0
        %637 = vmatprep.subr.bf16.mxu0 0
        %638 = vmatpush1.bf16.msra.mxu0 0
        %639 = vmatprep.subr.bf16.mxu0 0
        %640 = vmatpush1.bf16.msra.mxu0 0
        %641 = vmatprep.subr.bf16.mxu0 0
        %642 = vmatpush1.bf16.msra.mxu0 0
        %643 = vmatprep.subr.bf16.mxu0 0
        %644 = vmatpush1.bf16.msra.mxu0 0
        %645 = vmatprep.subr.bf16.mxu0 0
        %646 = vmatpush1.bf16.msra.mxu0 0
        %647 = vmatprep.subr.bf16.mxu0 0
        %648 = vmatpush1.bf16.msra.mxu0 0
        %649 = vmatprep.subr.bf16.mxu0 0
        %650 = vmatpush1.bf16.msra.mxu0 0
        %651 = vmatprep.subr.bf16.mxu0 0
        %652 = vmatpush1.bf16.msra.mxu0 0
        %653 = vmatprep.subr.bf16.mxu0 0
        %654 = vmatpush1.bf16.msra.mxu0 0
        %655 = vmatprep.subr.bf16.mxu0 0
        %656 = vmatpush1.bf16.msra.mxu0 0
        %657 = vmatprep.subr.bf16.mxu0 0
        %658 = vmatpush1.bf16.msra.mxu0 0
        %659 = vmatprep.subr.bf16.mxu0 0
        %660 = vmatpush1.bf16.msra.mxu0 0
        %661 = vmatprep.subr.bf16.mxu0 0
        %662 = vmatpush1.bf16.msra.mxu0 0
        %663 = vmatprep.mubr.bf16.mxu0 0
        %664 = vmatmul.mubr.bf16.gmra.mrb[0].mxu0 %v608
        %v665 = vpop.f32.mrb[0].mxu0
        %v666 = vadd.f32 %v499, %v665
        %v667 = vpop.f32.mrb[0].mxu0
        %v668 = vpop.f32.mrb[0].mxu0
        %v669 = vadd.f32 %v502, %v668
        %v670 = vpop.f32.mrb[0].mxu0
        %671 = vmatprep.mubr.bf16.mxu0 0
        %672 = vmatmul.mubr.bf16.gmra.mrb[0].mxu0 %v611
        %v673 = vpop.f32.mrb[0].mxu0
        %v674 = vadd.f32 %v507, %v673
        %v675 = vpop.f32.mrb[0].mxu0
        %v676 = vpop.f32.mrb[0].mxu0
        %v677 = vadd.f32 %v510, %v676
        %v678 = vpop.f32.mrb[0].mxu0
        %679 = vmatprep.mubr.bf16.mxu0 0
        %680 = vmatmul.mubr.bf16.gmra.mrb[0].mxu0 %v614
        %v681 = vpop.f32.mrb[0].mxu0
        %v682 = vadd.f32 %v515, %v681
        %v683 = vpop.f32.mrb[0].mxu0
        %v684 = vpop.f32.mrb[0].mxu0
        %v685 = vadd.f32 %v518, %v684
        %v686 = vpop.f32.mrb[0].mxu0
        %687 = vmatprep.mubr.bf16.mxu0 0
        %688 = vmatmul.mubr.bf16.gmra.mrb[0].mxu0 %v617
        %v689 = vpop.f32.mrb[0].mxu0
        %v690 = vadd.f32 %v523, %v689
        %v691 = vpop.f32.mrb[0].mxu0
        %v692 = vpop.f32.mrb[0].mxu0
        %v693 = vadd.f32 %v526, %v692
        %v694 = vpop.f32.mrb[0].mxu0
        %695 = vmatprep.mubr.bf16.mxu0 0
        %696 = vmatmul.mubr.bf16.gmra.mrb[0].mxu0 %v620
        %v697 = vpop.f32.mrb[0].mxu0
        %v698 = vadd.f32 %v531, %v697
        %v699 = vpop.f32.mrb[0].mxu0
        %v700 = vpop.f32.mrb[0].mxu0
        %v701 = vadd.f32 %v534, %v700
        %v702 = vpop.f32.mrb[0].mxu0
        %703 = vmatprep.mubr.bf16.mxu0 0
        %704 = vmatmul.mubr.bf16.gmra.mrb[0].mxu0 %v623
        %v705 = vpop.f32.mrb[0].mxu0
        %v706 = vadd.f32 %v539, %v705
        %v707 = vpop.f32.mrb[0].mxu0
        %v708 = vpop.f32.mrb[0].mxu0
        %v709 = vadd.f32 %v542, %v708
        %v710 = vpop.f32.mrb[0].mxu0
        %711 = vmatprep.mubr.bf16.mxu0 0
        %712 = vmatmul.mubr.bf16.gmra.mrb[0].mxu0 %v626
        %v713 = vpop.f32.mrb[0].mxu0
        %v714 = vadd.f32 %v547, %v713
        %v715 = vpop.f32.mrb[0].mxu0
        %v716 = vpop.f32.mrb[0].mxu0
        %v717 = vadd.f32 %v550, %v716
        %v718 = vpop.f32.mrb[0].mxu0
        %719 = vmatprep.mubr.bf16.mxu0 0
        %720 = vmatmul.mubr.bf16.gmra.mrb[0].mxu0 %v629
        %v721 = vpop.f32.mrb[0].mxu0
        %v722 = vadd.f32 %v555, %v721
        %v723 = vpop.f32.mrb[0].mxu0
        %v724 = vpop.f32.mrb[0].mxu0
        %v725 = vadd.f32 %v558, %v724
        %v726 = vpop.f32.mrb[0].mxu0
        %727 = vdwg.mxu0
        %v728 = vld [vmem:[%s4] sm:$0x1]
        %v730 = vlaneseq
        %v731 = vshrl.u32 %v730, 7
        %v732 = vsub.s32 0, %v731
        %v733 = vrot.slane %v728, %v732
        %v735 = vadd.f32 %v666, %v733
        %v736 = vadd.f32 %v669, %v733
        %v737 = vadd.f32 %v674, %v733
        %v738 = vadd.f32 %v677, %v733
        %v739 = vadd.f32 %v682, %v733
        %v740 = vadd.f32 %v685, %v733
        %v741 = vadd.f32 %v690, %v733
        %v742 = vadd.f32 %v693, %v733
        %v743 = vadd.f32 %v698, %v733
        %v744 = vadd.f32 %v701, %v733
        %v745 = vadd.f32 %v706, %v733
        %v746 = vadd.f32 %v709, %v733
        %v747 = vadd.f32 %v714, %v733
        %v748 = vadd.f32 %v717, %v733
        %v749 = vadd.f32 %v722, %v733
        %v750 = vadd.f32 %v725, %v733
        %v751 = vmax.f32 %v735, 0.0
        %v752 = vmax.f32 %v736, 0.0
        %v753 = vmax.f32 %v737, 0.0
        %v754 = vmax.f32 %v738, 0.0
        %v755 = vmax.f32 %v739, 0.0
        %v756 = vmax.f32 %v740, 0.0
        %v757 = vmax.f32 %v741, 0.0
        %v758 = vmax.f32 %v742, 0.0
        %v759 = vmax.f32 %v743, 0.0
        %v760 = vmax.f32 %v744, 0.0
        %v761 = vmax.f32 %v745, 0.0
        %v762 = vmax.f32 %v746, 0.0
        %v763 = vmax.f32 %v747, 0.0
        %v764 = vmax.f32 %v748, 0.0
        %v765 = vmax.f32 %v749, 0.0
        %v766 = vmax.f32 %v750, 0.0
        %v767 = vld [vmem:[%s5] sm:$0xf]
        %v768 = vld [vmem:[%s5 + $0x4] sm:$0xf]
        %v769 = vld [vmem:[%s5 + $0x8] sm:$0xf]
        %v770 = vld [vmem:[%s5 + $0xc] sm:$0xf]
        %v771 = vld [vmem:[%s5 + $0x10] sm:$0xf]
        %v772 = vld [vmem:[%s5 + $0x14] sm:$0xf]
        %v773 = vld [vmem:[%s5 + $0x18] sm:$0xf]
        %v774 = vld [vmem:[%s5 + $0x1c] sm:$0xf]
        %v775 = vld [vmem:[%s5 + $0x20] sm:$0xf]
        %v776 = vld [vmem:[%s5 + $0x24] sm:$0xf]
        %v777 = vld [vmem:[%s5 + $0x28] sm:$0xf]
        %v778 = vld [vmem:[%s5 + $0x2c] sm:$0xf]
        %v779 = vld [vmem:[%s5 + $0x30] sm:$0xf]
        %v780 = vld [vmem:[%s5 + $0x34] sm:$0xf]
        %v781 = vld [vmem:[%s5 + $0x38] sm:$0xf]
        %v782 = vld [vmem:[%s5 + $0x3c] sm:$0xf]
        %v783 = vld [vmem:[%s6] sm:$0x1]
        %v784 = vpack.c.bf16 %v752, %v751
        %v785 = vpack.c.bf16 %v754, %v753
        %v786 = vpack.c.bf16 %v756, %v755
        %v787 = vpack.c.bf16 %v758, %v757
        %v788 = vpack.c.bf16 %v760, %v759
        %v789 = vpack.c.bf16 %v762, %v761
        %v790 = vpack.c.bf16 %v764, %v763
        %v791 = vpack.c.bf16 %v766, %v765
        %v793 = vlaneseq
        %v794 = vshrl.u32 %v793, 7
        %v795 = vsub.s32 0, %v794
        %v796 = vrot.slane %v783, %v795
        %v814 = vunpack.c.l.b16 %v767
        %v815 = vunpack.c.l.b16 %v768
        %v816 = vunpack.c.l.b16 %v769
        %v817 = vunpack.c.l.b16 %v770
        %v818 = vunpack.c.l.b16 %v771
        %v819 = vunpack.c.l.b16 %v772
        %v820 = vunpack.c.l.b16 %v773
        %v821 = vunpack.c.l.b16 %v774
        %v822 = vunpack.c.l.b16 %v775
        %v823 = vunpack.c.l.b16 %v776
        %v824 = vunpack.c.l.b16 %v777
        %v825 = vunpack.c.l.b16 %v778
        %v826 = vunpack.c.l.b16 %v779
        %v827 = vunpack.c.l.b16 %v780
        %v828 = vunpack.c.l.b16 %v781
        %v829 = vunpack.c.l.b16 %v782
        %v830 = vpack.c.b16 %v815, %v814
        %v831 = vpack.c.b16 %v817, %v816
        %v832 = vpack.c.b16 %v819, %v818
        %v833 = vpack.c.b16 %v821, %v820
        %v834 = vpack.c.b16 %v823, %v822
        %v835 = vpack.c.b16 %v825, %v824
        %v836 = vpack.c.b16 %v827, %v826
        %v837 = vpack.c.b16 %v829, %v828
        %846 = vmatprep.subr.bf16.mxu0 0
        %847 = vmatpush1.bf16.msra.mxu0 %v830
        %848 = vmatprep.subr.bf16.mxu0 0
        %849 = vmatpush1.bf16.msra.mxu0 %v831
        %850 = vmatprep.subr.bf16.mxu0 0
        %851 = vmatpush1.bf16.msra.mxu0 %v832
        %852 = vmatprep.subr.bf16.mxu0 0
        %853 = vmatpush1.bf16.msra.mxu0 %v833
        %854 = vmatprep.subr.bf16.mxu0 0
        %855 = vmatpush1.bf16.msra.mxu0 %v834
        %856 = vmatprep.subr.bf16.mxu0 0
        %857 = vmatpush1.bf16.msra.mxu0 %v835
        %858 = vmatprep.subr.bf16.mxu0 0
        %859 = vmatpush1.bf16.msra.mxu0 %v836
        %860 = vmatprep.subr.bf16.mxu0 0
        %861 = vmatpush1.bf16.msra.mxu0 %v837
        %862 = vmatprep.subr.bf16.mxu0 0
        %863 = vmatpush1.bf16.msra.mxu0 0
        %864 = vmatprep.subr.bf16.mxu0 0
        %865 = vmatpush1.bf16.msra.mxu0 0
        %866 = vmatprep.subr.bf16.mxu0 0
        %867 = vmatpush1.bf16.msra.mxu0 0
        %868 = vmatprep.subr.bf16.mxu0 0
        %869 = vmatpush1.bf16.msra.mxu0 0
        %870 = vmatprep.subr.bf16.mxu0 0
        %871 = vmatpush1.bf16.msra.mxu0 0
        %872 = vmatprep.subr.bf16.mxu0 0
        %873 = vmatpush1.bf16.msra.mxu0 0
        %874 = vmatprep.subr.bf16.mxu0 0
        %875 = vmatpush1.bf16.msra.mxu0 0
        %876 = vmatprep.subr.bf16.mxu0 0
        %877 = vmatpush1.bf16.msra.mxu0 0
        %878 = vmatprep.mubr.bf16.mxu0 0
        %879 = vmatmul.mubr.bf16.gmra.mrb[0].mxu0 %v784
        %v880 = vpop.f32.mrb[0].mxu0
        %v881 = vadd.f32 %v796, %v880
        %v882 = vpop.f32.mrb[0].mxu0
        %v883 = vpop.f32.mrb[0].mxu0
        %v884 = vadd.f32 %v796, %v883
        %v885 = vpop.f32.mrb[0].mxu0
        %886 = vmatprep.mubr.bf16.mxu0 0
        %887 = vmatmul.mubr.bf16.gmra.mrb[0].mxu0 %v785
        %v888 = vpop.f32.mrb[0].mxu0
        %v889 = vadd.f32 %v796, %v888
        %v890 = vpop.f32.mrb[0].mxu0
        %v891 = vpop.f32.mrb[0].mxu0
        %v892 = vadd.f32 %v796, %v891
        %v893 = vpop.f32.mrb[0].mxu0
        %894 = vmatprep.mubr.bf16.mxu0 0
        %895 = vmatmul.mubr.bf16.gmra.mrb[0].mxu0 %v786
        %v896 = vpop.f32.mrb[0].mxu0
        %v897 = vadd.f32 %v796, %v896
        %v898 = vpop.f32.mrb[0].mxu0
        %v899 = vpop.f32.mrb[0].mxu0
        %v900 = vadd.f32 %v796, %v899
        %v901 = vpop.f32.mrb[0].mxu0
        %902 = vmatprep.mubr.bf16.mxu0 0
        %903 = vmatmul.mubr.bf16.gmra.mrb[0].mxu0 %v787
        %v904 = vpop.f32.mrb[0].mxu0
        %v905 = vadd.f32 %v796, %v904
        %v906 = vpop.f32.mrb[0].mxu0
        %v907 = vpop.f32.mrb[0].mxu0
        %v908 = vadd.f32 %v796, %v907
        %v909 = vpop.f32.mrb[0].mxu0
        %910 = vmatprep.mubr.bf16.mxu0 0
        %911 = vmatmul.mubr.bf16.gmra.mrb[0].mxu0 %v788
        %v912 = vpop.f32.mrb[0].mxu0
        %v913 = vadd.f32 %v796, %v912
        %v914 = vpop.f32.mrb[0].mxu0
        %v915 = vpop.f32.mrb[0].mxu0
        %v916 = vadd.f32 %v796, %v915
        %v917 = vpop.f32.mrb[0].mxu0
        %918 = vmatprep.mubr.bf16.mxu0 0
        %919 = vmatmul.mubr.bf16.gmra.mrb[0].mxu0 %v789
        %v920 = vpop.f32.mrb[0].mxu0
        %v921 = vadd.f32 %v796, %v920
        %v922 = vpop.f32.mrb[0].mxu0
        %v923 = vpop.f32.mrb[0].mxu0
        %v924 = vadd.f32 %v796, %v923
        %v925 = vpop.f32.mrb[0].mxu0
        %926 = vmatprep.mubr.bf16.mxu0 0
        %927 = vmatmul.mubr.bf16.gmra.mrb[0].mxu0 %v790
        %v928 = vpop.f32.mrb[0].mxu0
        %v929 = vadd.f32 %v796, %v928
        %v930 = vpop.f32.mrb[0].mxu0
        %v931 = vpop.f32.mrb[0].mxu0
        %v932 = vadd.f32 %v796, %v931
        %v933 = vpop.f32.mrb[0].mxu0
        %934 = vmatprep.mubr.bf16.mxu0 0
        %935 = vmatmul.mubr.bf16.gmra.mrb[0].mxu0 %v791
        %v936 = vpop.f32.mrb[0].mxu0
        %v937 = vadd.f32 %v796, %v936
        %v938 = vpop.f32.mrb[0].mxu0
        %v939 = vpop.f32.mrb[0].mxu0
        %v940 = vadd.f32 %v796, %v939
        %v941 = vpop.f32.mrb[0].mxu0
        %942 = vdwg.mxu0
        %v943 = vmax.f32 %v881, 0.0
        %v944 = vmax.f32 %v884, 0.0
        %v945 = vmax.f32 %v889, 0.0
        %v946 = vmax.f32 %v892, 0.0
        %v947 = vmax.f32 %v897, 0.0
        %v948 = vmax.f32 %v900, 0.0
        %v949 = vmax.f32 %v905, 0.0
        %v950 = vmax.f32 %v908, 0.0
        %v951 = vmax.f32 %v913, 0.0
        %v952 = vmax.f32 %v916, 0.0
        %v953 = vmax.f32 %v921, 0.0
        %v954 = vmax.f32 %v924, 0.0
        %v955 = vmax.f32 %v929, 0.0
        %v956 = vmax.f32 %v932, 0.0
        %v957 = vmax.f32 %v937, 0.0
        %v958 = vmax.f32 %v940, 0.0
        %v959 = vld [vmem:[%s7] sm:$0xf]
        %v960 = vld [vmem:[%s7 + $0x4] sm:$0xf]
        %v961 = vld [vmem:[%s7 + $0x8] sm:$0xf]
        %v962 = vld [vmem:[%s7 + $0xc] sm:$0xf]
        %v963 = vld [vmem:[%s7 + $0x10] sm:$0xf]
        %v964 = vld [vmem:[%s7 + $0x14] sm:$0xf]
        %v965 = vld [vmem:[%s7 + $0x18] sm:$0xf]
        %v966 = vld [vmem:[%s7 + $0x1c] sm:$0xf]
        %v967 = vld [vmem:[%s7 + $0x20] sm:$0xf]
        %v968 = vld [vmem:[%s7 + $0x24] sm:$0xf]
        %v969 = vld [vmem:[%s7 + $0x28] sm:$0xf]
        %v970 = vld [vmem:[%s7 + $0x2c] sm:$0xf]
        %v971 = vld [vmem:[%s7 + $0x30] sm:$0xf]
        %v972 = vld [vmem:[%s7 + $0x34] sm:$0xf]
        %v973 = vld [vmem:[%s7 + $0x38] sm:$0xf]
        %v974 = vld [vmem:[%s7 + $0x3c] sm:$0xf]
        %v975 = vld [vmem:[%s8] sm:$0x1]
        %v976 = vpack.c.bf16 %v944, %v943
        %v977 = vpack.c.bf16 %v946, %v945
        %v978 = vpack.c.bf16 %v948, %v947
        %v979 = vpack.c.bf16 %v950, %v949
        %v980 = vpack.c.bf16 %v952, %v951
        %v981 = vpack.c.bf16 %v954, %v953
        %v982 = vpack.c.bf16 %v956, %v955
        %v983 = vpack.c.bf16 %v958, %v957
        %v985 = vlaneseq
        %v986 = vshrl.u32 %v985, 7
        %v987 = vsub.s32 0, %v986
        %v988 = vrot.slane %v975, %v987
        %v1006 = vunpack.c.l.b16 %v959
        %v1007 = vunpack.c.l.b16 %v960
        %v1008 = vunpack.c.l.b16 %v961
        %v1009 = vunpack.c.l.b16 %v962
        %v1010 = vunpack.c.l.b16 %v963
        %v1011 = vunpack.c.l.b16 %v964
        %v1012 = vunpack.c.l.b16 %v965
        %v1013 = vunpack.c.l.b16 %v966
        %v1014 = vunpack.c.l.b16 %v967
        %v1015 = vunpack.c.l.b16 %v968
        %v1016 = vunpack.c.l.b16 %v969
        %v1017 = vunpack.c.l.b16 %v970
        %v1018 = vunpack.c.l.b16 %v971
        %v1019 = vunpack.c.l.b16 %v972
        %v1020 = vunpack.c.l.b16 %v973
        %v1021 = vunpack.c.l.b16 %v974
        %v1022 = vpack.c.b16 %v1007, %v1006
        %v1023 = vpack.c.b16 %v1009, %v1008
        %v1024 = vpack.c.b16 %v1011, %v1010
        %v1025 = vpack.c.b16 %v1013, %v1012
        %v1026 = vpack.c.b16 %v1015, %v1014
        %v1027 = vpack.c.b16 %v1017, %v1016
        %v1028 = vpack.c.b16 %v1019, %v1018
        %v1029 = vpack.c.b16 %v1021, %v1020
        %1038 = vmatprep.subr.bf16.mxu0 0
        %1039 = vmatpush1.bf16.msra.mxu0 %v1022
        %1040 = vmatprep.subr.bf16.mxu0 0
        %1041 = vmatpush1.bf16.msra.mxu0 %v1023
        %1042 = vmatprep.subr.bf16.mxu0 0
        %1043 = vmatpush1.bf16.msra.mxu0 %v1024
        %1044 = vmatprep.subr.bf16.mxu0 0
        %1045 = vmatpush1.bf16.msra.mxu0 %v1025
        %1046 = vmatprep.subr.bf16.mxu0 0
        %1047 = vmatpush1.bf16.msra.mxu0 %v1026
        %1048 = vmatprep.subr.bf16.mxu0 0
        %1049 = vmatpush1.bf16.msra.mxu0 %v1027
        %1050 = vmatprep.subr.bf16.mxu0 0
        %1051 = vmatpush1.bf16.msra.mxu0 %v1028
        %1052 = vmatprep.subr.bf16.mxu0 0
        %1053 = vmatpush1.bf16.msra.mxu0 %v1029
        %1054 = vmatprep.subr.bf16.mxu0 0
        %1055 = vmatpush1.bf16.msra.mxu0 0
        %1056 = vmatprep.subr.bf16.mxu0 0
        %1057 = vmatpush1.bf16.msra.mxu0 0
        %1058 = vmatprep.subr.bf16.mxu0 0
        %1059 = vmatpush1.bf16.msra.mxu0 0
        %1060 = vmatprep.subr.bf16.mxu0 0
        %1061 = vmatpush1.bf16.msra.mxu0 0
        %1062 = vmatprep.subr.bf16.mxu0 0
        %1063 = vmatpush1.bf16.msra.mxu0 0
        %1064 = vmatprep.subr.bf16.mxu0 0
        %1065 = vmatpush1.bf16.msra.mxu0 0
        %1066 = vmatprep.subr.bf16.mxu0 0
        %1067 = vmatpush1.bf16.msra.mxu0 0
        %1068 = vmatprep.subr.bf16.mxu0 0
        %1069 = vmatpush1.bf16.msra.mxu0 0
        %1070 = vmatprep.mubr.bf16.mxu0 0
        %1071 = vmatmul.mubr.bf16.gmra.mrb[0].mxu0 %v976
        %v1072 = vpop.f32.mrb[0].mxu0
        %v1073 = vadd.f32 %v988, %v1072
        %v1074 = vpop.f32.mrb[0].mxu0
        %v1075 = vpop.f32.mrb[0].mxu0
        %v1076 = vadd.f32 %v988, %v1075
        %v1077 = vpop.f32.mrb[0].mxu0
        %1078 = vmatprep.mubr.bf16.mxu0 0
        %1079 = vmatmul.mubr.bf16.gmra.mrb[0].mxu0 %v977
        %v1080 = vpop.f32.mrb[0].mxu0
        %v1081 = vadd.f32 %v988, %v1080
        %v1082 = vpop.f32.mrb[0].mxu0
        %v1083 = vpop.f32.mrb[0].mxu0
        %v1084 = vadd.f32 %v988, %v1083
        %v1085 = vpop.f32.mrb[0].mxu0
        %1086 = vmatprep.mubr.bf16.mxu0 0
        %1087 = vmatmul.mubr.bf16.gmra.mrb[0].mxu0 %v978
        %v1088 = vpop.f32.mrb[0].mxu0
        %v1089 = vadd.f32 %v988, %v1088
        %v1090 = vpop.f32.mrb[0].mxu0
        %v1091 = vpop.f32.mrb[0].mxu0
        %v1092 = vadd.f32 %v988, %v1091
        %v1093 = vpop.f32.mrb[0].mxu0
        %1094 = vmatprep.mubr.bf16.mxu0 0
        %1095 = vmatmul.mubr.bf16.gmra.mrb[0].mxu0 %v979
        %v1096 = vpop.f32.mrb[0].mxu0
        %v1097 = vadd.f32 %v988, %v1096
        %v1098 = vpop.f32.mrb[0].mxu0
        %v1099 = vpop.f32.mrb[0].mxu0
        %v1100 = vadd.f32 %v988, %v1099
        %v1101 = vpop.f32.mrb[0].mxu0
        %1102 = vmatprep.mubr.bf16.mxu0 0
        %1103 = vmatmul.mubr.bf16.gmra.mrb[0].mxu0 %v980
        %v1104 = vpop.f32.mrb[0].mxu0
        %v1105 = vadd.f32 %v988, %v1104
        %v1106 = vpop.f32.mrb[0].mxu0
        %v1107 = vpop.f32.mrb[0].mxu0
        %v1108 = vadd.f32 %v988, %v1107
        %v1109 = vpop.f32.mrb[0].mxu0
        %1110 = vmatprep.mubr.bf16.mxu0 0
        %1111 = vmatmul.mubr.bf16.gmra.mrb[0].mxu0 %v981
        %v1112 = vpop.f32.mrb[0].mxu0
        %v1113 = vadd.f32 %v988, %v1112
        %v1114 = vpop.f32.mrb[0].mxu0
        %v1115 = vpop.f32.mrb[0].mxu0
        %v1116 = vadd.f32 %v988, %v1115
        %v1117 = vpop.f32.mrb[0].mxu0
        %1118 = vmatprep.mubr.bf16.mxu0 0
        %1119 = vmatmul.mubr.bf16.gmra.mrb[0].mxu0 %v982
        %v1120 = vpop.f32.mrb[0].mxu0
        %v1121 = vadd.f32 %v988, %v1120
        %v1122 = vpop.f32.mrb[0].mxu0
        %v1123 = vpop.f32.mrb[0].mxu0
        %v1124 = vadd.f32 %v988, %v1123
        %v1125 = vpop.f32.mrb[0].mxu0
        %1126 = vmatprep.mubr.bf16.mxu0 0
        %1127 = vmatmul.mubr.bf16.gmra.mrb[0].mxu0 %v983
        %v1128 = vpop.f32.mrb[0].mxu0
        %v1129 = vadd.f32 %v988, %v1128
        %v1130 = vpop.f32.mrb[0].mxu0
        %v1131 = vpop.f32.mrb[0].mxu0
        %v1132 = vadd.f32 %v988, %v1131
        %v1133 = vpop.f32.mrb[0].mxu0
        %1134 = vdwg.mxu0
        %v1135 = vpack.c.bf16 %v1076, %v1073
        %v1136 = vpack.c.bf16 %v1084, %v1081
        %v1137 = vpack.c.bf16 %v1092, %v1089
        %v1138 = vpack.c.bf16 %v1100, %v1097
        %v1139 = vpack.c.bf16 %v1108, %v1105
        %v1140 = vpack.c.bf16 %v1116, %v1113
        %v1141 = vpack.c.bf16 %v1124, %v1121
        %v1142 = vpack.c.bf16 %v1132, %v1129
        %v1151 = vunpack.c.l.b16 %v1135
        %v1152 = vunpack.c.h.b16 %v1135
        %v1153 = vunpack.c.l.b16 %v1136
        %v1154 = vunpack.c.h.b16 %v1136
        %v1155 = vunpack.c.l.b16 %v1137
        %v1156 = vunpack.c.h.b16 %v1137
        %v1157 = vunpack.c.l.b16 %v1138
        %v1158 = vunpack.c.h.b16 %v1138
        %v1159 = vunpack.c.l.b16 %v1139
        %v1160 = vunpack.c.h.b16 %v1139
        %v1161 = vunpack.c.l.b16 %v1140
        %v1162 = vunpack.c.h.b16 %v1140
        %v1163 = vunpack.c.l.b16 %v1141
        %v1164 = vunpack.c.h.b16 %v1141
        %v1165 = vunpack.c.l.b16 %v1142
        %v1166 = vunpack.c.h.b16 %v1142
        %v1167 = vpack.c.b16 %v1151, %v1151
        %v1168 = vpack.c.b16 %v1152, %v1152
        %v1169 = vpack.c.b16 %v1153, %v1153
        %v1170 = vpack.c.b16 %v1154, %v1154
        %v1171 = vpack.c.b16 %v1155, %v1155
        %v1172 = vpack.c.b16 %v1156, %v1156
        %v1173 = vpack.c.b16 %v1157, %v1157
        %v1174 = vpack.c.b16 %v1158, %v1158
        %v1175 = vpack.c.b16 %v1159, %v1159
        %v1176 = vpack.c.b16 %v1160, %v1160
        %v1177 = vpack.c.b16 %v1161, %v1161
        %v1178 = vpack.c.b16 %v1162, %v1162
        %v1179 = vpack.c.b16 %v1163, %v1163
        %v1180 = vpack.c.b16 %v1164, %v1164
        %v1181 = vpack.c.b16 %v1165, %v1165
        %v1182 = vpack.c.b16 %v1166, %v1166
        %1199 = vst [vmem:[%s342] sm:$0xf] %v1167
        %1200 = vst [vmem:[%s342 + $0x4] sm:$0xf] %v1168
        %1201 = vst [vmem:[%s342 + $0x8] sm:$0xf] %v1169
        %1202 = vst [vmem:[%s342 + $0xc] sm:$0xf] %v1170
        %1203 = vst [vmem:[%s342 + $0x10] sm:$0xf] %v1171
        %1204 = vst [vmem:[%s342 + $0x14] sm:$0xf] %v1172
        %1205 = vst [vmem:[%s342 + $0x18] sm:$0xf] %v1173
        %1206 = vst [vmem:[%s342 + $0x1c] sm:$0xf] %v1174
        %1207 = vst [vmem:[%s342 + $0x20] sm:$0xf] %v1175
        %1208 = vst [vmem:[%s342 + $0x24] sm:$0xf] %v1176
        %1209 = vst [vmem:[%s342 + $0x28] sm:$0xf] %v1177
        %1210 = vst [vmem:[%s342 + $0x2c] sm:$0xf] %v1178
        %1211 = vst [vmem:[%s342 + $0x30] sm:$0xf] %v1179
        %1212 = vst [vmem:[%s342 + $0x34] sm:$0xf] %v1180
        %1213 = vst [vmem:[%s342 + $0x38] sm:$0xf] %v1181
        %1214 = vst [vmem:[%s342 + $0x3c] sm:$0xf] %v1182
        %s1215 = sand.u32 %s230, 1
        %s1216 = scalar_lea.sflag [#allocation3], %s1215
        %s1217 = sand.u32 %s230, 1
        %s1218 = smul.addr %s1217, 64
        %s1219 = scalar_lea.vmem [#allocation2], %s1218
        // Predicated region
        $region57: #{tpu_custom_call.1} parent=55 // pred_check
          %p1220 = pneg %p240
        $region58: #{tpu_custom_call.1} parent=55 // pred_check_branch
          %1222 = sbr.rel (%p1220) target = $region60
        $region59: #{tpu_custom_call.1} parent=55 // pred_region
          %s1223 = smul.u32 16, %s23
          %s1225 = ssub.s32 1024, 1024
          %1226 = vsyncadd %s1216, %s1225
          %s1227 = smul.addr %s1223, 64
          %s1228 = scalar_lea.hbm %s9, %s1227
          %s1229 = sshll.u32 %s1219, 4
          %s1230 = int_to_ptr.vmem [resolvable:$true] %s1229
          %1235 = dma.vmem_to_hbm [thread:$0]  %s1230, 1024, %s1228, %s1216, 64, 64, 4
        $region60: #{tpu_custom_call.1} parent=55 // pred_fallthru
          _
      $region56: #{tpu_custom_call.1} parent=5 // pred_fallthru
        _
      %p1236 = scmp.le.s32.totalorder 2, %s18
      // Predicated region
      $region61: #{tpu_custom_call.1} parent=5 // pred_check
        %p1237 = pneg %p1236
      $region62: #{tpu_custom_call.1} parent=5 // pred_check_branch
        %1239 = sbr.rel (%p1237) target = $region64
      $region63: #{tpu_custom_call.1} parent=5 // pred_region
        %s1240 = ssub.s32 %s18, 2
        // Predicated region
        $region65: #{tpu_custom_call.1} parent=63 // pred_check
          %p1241 = pneg %p246
        $region66: #{tpu_custom_call.1} parent=63 // pred_check_branch
          %1243 = sbr.rel (%p1241) target = $region68
        $region67: #{tpu_custom_call.1} parent=63 // pred_region
          %s1244 = sand.u32 %s231, 1
          %s1245 = scalar_lea.sflag [#allocation3], %s1244
          %s1246 = sand.u32 %s231, 1
          %s1247 = smul.addr %s1246, 64
          %s1248 = scalar_lea.vmem [#allocation2], %s1247
          %1249 = dma.done %s1245, 1024
        $region68: #{tpu_custom_call.1} parent=63 // pred_fallthru
          _
      $region64: #{tpu_custom_call.1} parent=5 // pred_fallthru
        _
    $region6: #{tpu_custom_call.1} parent=1 // loop_footer
      %s22 = sadd.s32 1, %s18
    $region7: #{tpu_custom_call.1} parent=1 // loop_footer_branch
      %17 = sbr.rel target = $region3
    $region8: #{tpu_custom_call.1} parent=1 // loop_exit
      _
    %1250 = vsyncpa [#allocation3], 1
    %s1251 = scalar_lea.sflag [#allocation3], 1
    %1252 = vsyncpa %s1251, 1

</llo_original>
